<compile_context>
chip_gen: v6e
topology: v6e:2x2x1
jax: 0.10.0
libtpu: 0.0.40
codegen_flags: <defaults>
</compile_context>

<pallas_src>
import functools

import jax
import jax.numpy as jnp
from jax.experimental import pallas as pl
from jax.experimental.pallas import tpu as pltpu


# ----------------------------------------------------------------------------
# Fused kernel: composite + concat(mask) + conv3x3/relu + conv3x3/sigmoid
# Layouts inside the kernel are channels-first with pixels on the lane axis.
# ----------------------------------------------------------------------------
def refine_fused_kernel(orig_ref, coarse_ref, mask_ref,
                        w1_ref, b1_ref, w2_ref, b2_ref,
                        o_ref, xpad_ref, fpad_ref, *, H, W):
    Wp = W + 2              # padded row width
    HWp = H * Wp            # "wide" pixel count (valid columns: 0..W-1 of each row)

    # ---- composite the coarse prediction into the hole; append the mask channel
    m = mask_ref[0]                                               # (1, H*W)
    comp = coarse_ref[0] * m + orig_ref[0] * (1.0 - m)            # (3, H*W)
    x = jnp.concatenate([comp, m], axis=0)                        # (Cin, H*W)

    # ---- zero-padded, row-flattened input planes (in-kernel padding, stays in VMEM)
    xpad_ref[...] = jnp.zeros_like(xpad_ref)
    for h in range(H):
        xpad_ref[:, (h + 1) * Wp + 1:(h + 1) * Wp + 1 + W] = x[:, h * W:(h + 1) * W]

    # ---- conv1 as ONE im2col matmul on the MXU (K = 9*Cin), bf16 in / f32 accumulate
    xpad = xpad_ref[...]                                          # (Cin, Lpad) f32
    p1 = jnp.concatenate(
        [xpad[:, kh * Wp + kw:kh * Wp + kw + HWp]
         for kh in range(3) for kw in range(3)], axis=0)          # (9*Cin, HWp)
    feat = jnp.dot(w1_ref[...].astype(jnp.bfloat16),
                   p1.astype(jnp.bfloat16),
                   preferred_element_type=jnp.float32)            # (C1, HWp)
    feat = jnp.maximum(feat + b1_ref[...], 0.0)

    # ---- re-pad the hidden feature map (never leaves VMEM)
    fpad_ref[...] = jnp.zeros_like(fpad_ref)
    for h in range(H):
        fpad_ref[:, (h + 1) * Wp + 1:(h + 1) * Wp + 1 + W] = feat[:, h * Wp:h * Wp + W]

    # ---- conv2 as ONE im2col matmul (K = 9*C1)
    fpad = fpad_ref[...]                                          # (C1, Lpad) f32
    p2 = jnp.concatenate(
        [fpad[:, kh * Wp + kw:kh * Wp + kw + HWp]
         for kh in range(3) for kw in range(3)], axis=0)          # (9*C1, HWp)
    out = jnp.dot(w2_ref[...].astype(jnp.bfloat16),
                  p2.astype(jnp.bfloat16),
                  preferred_element_type=jnp.float32)             # (Cout, HWp)
    out = jax.nn.sigmoid(out + b2_ref[...])

    # ---- drop the 2 junk columns per wide row; store channels-first, lane-dense
    for h in range(H):
        o_ref[0, :, h * W:(h + 1) * W] = out[:, h * Wp:h * Wp + W]


# ----------------------------------------------------------------------------
# Parameters (HWIO conv weights) and wrapper
# ----------------------------------------------------------------------------
def init_params(hidden=16):
    k1, k2 = jax.random.split(jax.random.PRNGKey(0))
    w1 = jax.random.normal(k1, (3, 3, 4, hidden), jnp.float32) * 0.1      # HWIO
    b1 = jnp.zeros((hidden,), jnp.float32)
    w2 = jax.random.normal(k2, (3, 3, hidden, 3), jnp.float32) * 0.1      # HWIO
    b2 = jnp.zeros((3,), jnp.float32)
    return {"w1": w1, "b1": b1, "w2": w2, "b2": b2}


@jax.jit
def refine_forward(params, original_image, mask, prediction_coarse):
    """original_image (N,3,H,W), mask (N,1,H,W), prediction_coarse (N,3,H,W) -> (N,3,H,W)."""
    N, C, H, W = original_image.shape
    HW = H * W
    Cin = C + 1
    C1 = params["w1"].shape[-1]
    Cout = params["w2"].shape[-1]

    # NCHW -> (N, C, H*W): free reshapes (no transposes); pixels land on the lane axis.
    orig = original_image.reshape(N, C, HW).astype(jnp.float32)
    coarse = prediction_coarse.reshape(N, C, HW).astype(jnp.float32)
    m = mask.reshape(N, 1, HW).astype(jnp.float32)

    # HWIO weights -> (Cout, 9*Cin), column order (kh*3+kw)*Cin + ci to match the
    # kernel's im2col row ordering.
    w1_mat = jnp.transpose(params["w1"], (3, 0, 1, 2)).reshape(C1, 9 * Cin)
    w2_mat = jnp.transpose(params["w2"], (3, 0, 1, 2)).reshape(Cout, 9 * C1)
    b1 = params["b1"].reshape(C1, 1)
    b2 = params["b2"].reshape(Cout, 1)

    # flattened padded-plane length: (H+2)*(W+2) + tap-shift tail, rounded to 128 lanes
    lpad = -(-((H + 2) * (W + 2) + 2) // 128) * 128

    kernel = functools.partial(refine_fused_kernel, H=H, W=W)
    out_flat = pl.pallas_call(
        kernel,
        out_shape=jax.ShapeDtypeStruct((N, Cout, HW), jnp.float32),
        grid=(N,),
        in_specs=[
            pl.BlockSpec((1, C, HW), lambda n: (n, 0, 0)),
            pl.BlockSpec((1, C, HW), lambda n: (n, 0, 0)),
            pl.BlockSpec((1, 1, HW), lambda n: (n, 0, 0)),
            pl.BlockSpec((C1, 9 * Cin), lambda n: (0, 0)),
            pl.BlockSpec((C1, 1), lambda n: (0, 0)),
            pl.BlockSpec((Cout, 9 * C1), lambda n: (0, 0)),
            pl.BlockSpec((Cout, 1), lambda n: (0, 0)),
        ],
        out_specs=pl.BlockSpec((1, Cout, HW), lambda n: (n, 0, 0)),
        scratch_shapes=[
            pltpu.VMEM((Cin, lpad), jnp.float32),   # padded composite+mask planes
            pltpu.VMEM((C1, lpad), jnp.float32),    # padded hidden feature planes
        ],
        compiler_params=pltpu.CompilerParams(
            dimension_semantics=("parallel",)),     # shard batch across v7x's 2 TCs
    )(orig, coarse, m, w1_mat, b1, w2_mat, b2)

    return out_flat.reshape(N, Cout, H, W)


# ----------------------------------------------------------------------------
# Pure-JAX reference of the same stand-in network (for correctness check)
# ----------------------------------------------------------------------------
def _conv3x3_ref(x_nchw, w_hwio, b):
    y = jax.lax.conv_general_dilated(
        x_nchw.astype(jnp.bfloat16), w_hwio.astype(jnp.bfloat16),
        window_strides=(1, 1), padding=((1, 1), (1, 1)),
        dimension_numbers=("NCHW", "HWIO", "NCHW"),
        preferred_element_type=jnp.float32)
    return y + b.reshape(1, -1, 1, 1)


def refine_reference(params, original_image, mask, prediction_coarse):
    orig = original_image.astype(jnp.float32)
    coarse = prediction_coarse.astype(jnp.float32)
    m = mask.astype(jnp.float32)
    comp = coarse * m + orig * (1.0 - m)
    x = jnp.concatenate([comp, m], axis=1)
    feat = jnp.maximum(_conv3x3_ref(x, params["w1"], params["b1"]), 0.0)
    return jax.nn.sigmoid(_conv3x3_ref(feat, params["w2"], params["b2"]))


if __name__ == "__main__":
    N, C, H, W = 2, 3, 16, 16
    k1, k2, k3 = jax.random.split(jax.random.PRNGKey(0), 3)
    original_image = jax.random.uniform(k1, (N, C, H, W), jnp.float32)
    prediction_coarse = jax.random.uniform(k2, (N, C, H, W), jnp.float32)
    mask = (jax.random.uniform(k3, (N, 1, H, W), jnp.float32) > 0.5
            ).astype(jnp.float32)

    params = init_params(hidden=16)

    out = refine_forward(params, original_image, mask, prediction_coarse)
    out = jax.block_until_ready(out)

    assert out.shape == (N, C, H, W), out.shape
    assert bool(jnp.all(jnp.isfinite(out)))

    ref = refine_reference(params, original_image, mask, prediction_coarse)
    assert bool(jnp.allclose(out, ref, atol=2e-2, rtol=2e-2)), \
        float(jnp.max(jnp.abs(out - ref)))

    print("KERNEL_OK")
</pallas_src>

<mosaic_0001>
module attributes {stable_mosaic.version = 11 : i64} {
  func.func @refine_fused_kernel(%arg0: i32, %arg1: memref<1x3x256xf32, #tpu.memory_space<vmem>>, %arg2: memref<1x3x256xf32, #tpu.memory_space<vmem>>, %arg3: memref<1x1x256xf32, #tpu.memory_space<vmem>>, %arg4: memref<16x36xf32, #tpu.memory_space<vmem>>, %arg5: memref<16x1xf32, #tpu.memory_space<vmem>>, %arg6: memref<3x144xf32, #tpu.memory_space<vmem>>, %arg7: memref<3x1xf32, #tpu.memory_space<vmem>>, %arg8: memref<1x3x256xf32, #tpu.memory_space<vmem>>, %arg9: memref<4x384xf32, #tpu.memory_space<vmem>>, %arg10: memref<16x384xf32, #tpu.memory_space<vmem>>) attributes {dimension_semantics = [#tpu.dimension_semantics<parallel>], iteration_bounds = array<i64: 2>, scalar_prefetch = 0 : i64, scratch_operands = 2 : i64, tpu.core_type = #tpu.core_type<tc>, window_params = [{transform_indices = @transform_0, window_bounds = array<i64: 1, 3, 256>}, {transform_indices = @transform_1, window_bounds = array<i64: 1, 3, 256>}, {transform_indices = @transform_2, window_bounds = array<i64: 1, 1, 256>}, {pipeline_mode = #tpu.pipeline_mode<synchronous>, transform_indices = @transform_3, window_bounds = array<i64: 16, 36>}, {pipeline_mode = #tpu.pipeline_mode<synchronous>, transform_indices = @transform_4, window_bounds = array<i64: 16, 1>}, {pipeline_mode = #tpu.pipeline_mode<synchronous>, transform_indices = @transform_5, window_bounds = array<i64: 3, 144>}, {pipeline_mode = #tpu.pipeline_mode<synchronous>, transform_indices = @transform_6, window_bounds = array<i64: 3, 1>}, {transform_indices = @transform_7, window_bounds = array<i64: 1, 3, 256>}]} {
    %c0 = arith.constant 0 : index
    %c0_0 = arith.constant 0 : index
    %c0_1 = arith.constant 0 : index
    %0 = vector.load %arg3[%c0, %c0_0, %c0_1] : memref<1x1x256xf32, #tpu.memory_space<vmem>>, vector<1x1x256xf32>
    %1 = vector.shape_cast %0 : vector<1x1x256xf32> to vector<1x256xf32>
    %c0_2 = arith.constant 0 : index
    %c0_3 = arith.constant 0 : index
    %c0_4 = arith.constant 0 : index
    %2 = vector.load %arg2[%c0_2, %c0_3, %c0_4] : memref<1x3x256xf32, #tpu.memory_space<vmem>>, vector<1x3x256xf32>
    %3 = vector.shape_cast %2 : vector<1x3x256xf32> to vector<3x256xf32>
    %4 = vector.broadcast %1 : vector<1x256xf32> to vector<3x256xf32>
    %5 = arith.mulf %3, %4 : vector<3x256xf32>
    %c0_5 = arith.constant 0 : index
    %c0_6 = arith.constant 0 : index
    %c0_7 = arith.constant 0 : index
    %6 = vector.load %arg1[%c0_5, %c0_6, %c0_7] : memref<1x3x256xf32, #tpu.memory_space<vmem>>, vector<1x3x256xf32>
    %7 = vector.shape_cast %6 : vector<1x3x256xf32> to vector<3x256xf32>
    %cst = arith.constant 1.000000e+00 : f32
    %8 = vector.broadcast %cst : f32 to vector<1x256xf32>
    %9 = arith.subf %8, %1 : vector<1x256xf32>
    %10 = vector.broadcast %9 : vector<1x256xf32> to vector<3x256xf32>
    %11 = arith.mulf %7, %10 : vector<3x256xf32>
    %12 = arith.addf %5, %11 : vector<3x256xf32>
    %13 = tpu.concatenate %12, %1 in 0 : vector<3x256xf32>, vector<1x256xf32> -> vector<4x256xf32>
    %cst_8 = arith.constant 0.000000e+00 : f32
    %14 = vector.broadcast %cst_8 : f32 to vector<4x384xf32>
    %c0_9 = arith.constant 0 : index
    %c0_10 = arith.constant 0 : index
    %15 = vector.load %arg9[%c0_9, %c0_10] : memref<4x384xf32, #tpu.memory_space<vmem>>, vector<4x384xf32>
    tpu.vector_store %arg9[%c0_9, %c0_10], %14 {strides = array<i32>} : memref<4x384xf32, #tpu.memory_space<vmem>>, vector<4x384xf32>,
    %16 = vector.extract_strided_slice %13 {offsets = [0, 0], sizes = [4, 16], strides = [1, 1]} : vector<4x256xf32> to vector<4x16xf32>
    %c0_11 = arith.constant 0 : index
    %c19 = arith.constant 19 : index
    %17 = vector.load %arg9[%c0_11, %c19] : memref<4x384xf32, #tpu.memory_space<vmem>>, vector<4x16xf32>
    tpu.vector_store %arg9[%c0_11, %c19], %16 {strides = array<i32>} : memref<4x384xf32, #tpu.memory_space<vmem>>, vector<4x16xf32>,
    %18 = vector.extract_strided_slice %13 {offsets = [0, 16], sizes = [4, 16], strides = [1, 1]} : vector<4x256xf32> to vector<4x16xf32>
    %c0_12 = arith.constant 0 : index
    %c37 = arith.constant 37 : index
    %19 = vector.load %arg9[%c0_12, %c37] : memref<4x384xf32, #tpu.memory_space<vmem>>, vector<4x16xf32>
    tpu.vector_store %arg9[%c0_12, %c37], %18 {strides = array<i32>} : memref<4x384xf32, #tpu.memory_space<vmem>>, vector<4x16xf32>,
    %20 = vector.extract_strided_slice %13 {offsets = [0, 32], sizes = [4, 16], strides = [1, 1]} : vector<4x256xf32> to vector<4x16xf32>
    %c0_13 = arith.constant 0 : index
    %c55 = arith.constant 55 : index
    %21 = vector.load %arg9[%c0_13, %c55] : memref<4x384xf32, #tpu.memory_space<vmem>>, vector<4x16xf32>
    tpu.vector_store %arg9[%c0_13, %c55], %20 {strides = array<i32>} : memref<4x384xf32, #tpu.memory_space<vmem>>, vector<4x16xf32>,
    %22 = vector.extract_strided_slice %13 {offsets = [0, 48], sizes = [4, 16], strides = [1, 1]} : vector<4x256xf32> to vector<4x16xf32>
    %c0_14 = arith.constant 0 : index
    %c73 = arith.constant 73 : index
    %23 = vector.load %arg9[%c0_14, %c73] : memref<4x384xf32, #tpu.memory_space<vmem>>, vector<4x16xf32>
    tpu.vector_store %arg9[%c0_14, %c73], %22 {strides = array<i32>} : memref<4x384xf32, #tpu.memory_space<vmem>>, vector<4x16xf32>,
    %24 = vector.extract_strided_slice %13 {offsets = [0, 64], sizes = [4, 16], strides = [1, 1]} : vector<4x256xf32> to vector<4x16xf32>
    %c0_15 = arith.constant 0 : index
    %c91 = arith.constant 91 : index
    %25 = vector.load %arg9[%c0_15, %c91] : memref<4x384xf32, #tpu.memory_space<vmem>>, vector<4x16xf32>
    tpu.vector_store %arg9[%c0_15, %c91], %24 {strides = array<i32>} : memref<4x384xf32, #tpu.memory_space<vmem>>, vector<4x16xf32>,
    %26 = vector.extract_strided_slice %13 {offsets = [0, 80], sizes = [4, 16], strides = [1, 1]} : vector<4x256xf32> to vector<4x16xf32>
    %c0_16 = arith.constant 0 : index
    %c109 = arith.constant 109 : index
    %27 = vector.load %arg9[%c0_16, %c109] : memref<4x384xf32, #tpu.memory_space<vmem>>, vector<4x16xf32>
    tpu.vector_store %arg9[%c0_16, %c109], %26 {strides = array<i32>} : memref<4x384xf32, #tpu.memory_space<vmem>>, vector<4x16xf32>,
    %28 = vector.extract_strided_slice %13 {offsets = [0, 96], sizes = [4, 16], strides = [1, 1]} : vector<4x256xf32> to vector<4x16xf32>
    %c0_17 = arith.constant 0 : index
    %c127 = arith.constant 127 : index
    %29 = vector.load %arg9[%c0_17, %c127] : memref<4x384xf32, #tpu.memory_space<vmem>>, vector<4x16xf32>
    tpu.vector_store %arg9[%c0_17, %c127], %28 {strides = array<i32>} : memref<4x384xf32, #tpu.memory_space<vmem>>, vector<4x16xf32>,
    %30 = vector.extract_strided_slice %13 {offsets = [0, 112], sizes = [4, 16], strides = [1, 1]} : vector<4x256xf32> to vector<4x16xf32>
    %c0_18 = arith.constant 0 : index
    %c145 = arith.constant 145 : index
    %31 = vector.load %arg9[%c0_18, %c145] : memref<4x384xf32, #tpu.memory_space<vmem>>, vector<4x16xf32>
    tpu.vector_store %arg9[%c0_18, %c145], %30 {strides = array<i32>} : memref<4x384xf32, #tpu.memory_space<vmem>>, vector<4x16xf32>,
    %32 = vector.extract_strided_slice %13 {offsets = [0, 128], sizes = [4, 16], strides = [1, 1]} : vector<4x256xf32> to vector<4x16xf32>
    %c0_19 = arith.constant 0 : index
    %c163 = arith.constant 163 : index
    %33 = vector.load %arg9[%c0_19, %c163] : memref<4x384xf32, #tpu.memory_space<vmem>>, vector<4x16xf32>
    tpu.vector_store %arg9[%c0_19, %c163], %32 {strides = array<i32>} : memref<4x384xf32, #tpu.memory_space<vmem>>, vector<4x16xf32>,
    %34 = vector.extract_strided_slice %13 {offsets = [0, 144], sizes = [4, 16], strides = [1, 1]} : vector<4x256xf32> to vector<4x16xf32>
    %c0_20 = arith.constant 0 : index
    %c181 = arith.constant 181 : index
    %35 = vector.load %arg9[%c0_20, %c181] : memref<4x384xf32, #tpu.memory_space<vmem>>, vector<4x16xf32>
    tpu.vector_store %arg9[%c0_20, %c181], %34 {strides = array<i32>} : memref<4x384xf32, #tpu.memory_space<vmem>>, vector<4x16xf32>,
    %36 = vector.extract_strided_slice %13 {offsets = [0, 160], sizes = [4, 16], strides = [1, 1]} : vector<4x256xf32> to vector<4x16xf32>
    %c0_21 = arith.constant 0 : index
    %c199 = arith.constant 199 : index
    %37 = vector.load %arg9[%c0_21, %c199] : memref<4x384xf32, #tpu.memory_space<vmem>>, vector<4x16xf32>
    tpu.vector_store %arg9[%c0_21, %c199], %36 {strides = array<i32>} : memref<4x384xf32, #tpu.memory_space<vmem>>, vector<4x16xf32>,
    %38 = vector.extract_strided_slice %13 {offsets = [0, 176], sizes = [4, 16], strides = [1, 1]} : vector<4x256xf32> to vector<4x16xf32>
    %c0_22 = arith.constant 0 : index
    %c217 = arith.constant 217 : index
    %39 = vector.load %arg9[%c0_22, %c217] : memref<4x384xf32, #tpu.memory_space<vmem>>, vector<4x16xf32>
    tpu.vector_store %arg9[%c0_22, %c217], %38 {strides = array<i32>} : memref<4x384xf32, #tpu.memory_space<vmem>>, vector<4x16xf32>,
    %40 = vector.extract_strided_slice %13 {offsets = [0, 192], sizes = [4, 16], strides = [1, 1]} : vector<4x256xf32> to vector<4x16xf32>
    %c0_23 = arith.constant 0 : index
    %c235 = arith.constant 235 : index
    %41 = vector.load %arg9[%c0_23, %c235] : memref<4x384xf32, #tpu.memory_space<vmem>>, vector<4x16xf32>
    tpu.vector_store %arg9[%c0_23, %c235], %40 {strides = array<i32>} : memref<4x384xf32, #tpu.memory_space<vmem>>, vector<4x16xf32>,
    %42 = vector.extract_strided_slice %13 {offsets = [0, 208], sizes = [4, 16], strides = [1, 1]} : vector<4x256xf32> to vector<4x16xf32>
    %c0_24 = arith.constant 0 : index
    %c253 = arith.constant 253 : index
    %43 = vector.load %arg9[%c0_24, %c253] : memref<4x384xf32, #tpu.memory_space<vmem>>, vector<4x16xf32>
    tpu.vector_store %arg9[%c0_24, %c253], %42 {strides = array<i32>} : memref<4x384xf32, #tpu.memory_space<vmem>>, vector<4x16xf32>,
    %44 = vector.extract_strided_slice %13 {offsets = [0, 224], sizes = [4, 16], strides = [1, 1]} : vector<4x256xf32> to vector<4x16xf32>
    %c0_25 = arith.constant 0 : index
    %c271 = arith.constant 271 : index
    %45 = vector.load %arg9[%c0_25, %c271] : memref<4x384xf32, #tpu.memory_space<vmem>>, vector<4x16xf32>
    tpu.vector_store %arg9[%c0_25, %c271], %44 {strides = array<i32>} : memref<4x384xf32, #tpu.memory_space<vmem>>, vector<4x16xf32>,
    %46 = vector.extract_strided_slice %13 {offsets = [0, 240], sizes = [4, 16], strides = [1, 1]} : vector<4x256xf32> to vector<4x16xf32>
    %c0_26 = arith.constant 0 : index
    %c289 = arith.constant 289 : index
    %47 = vector.load %arg9[%c0_26, %c289] : memref<4x384xf32, #tpu.memory_space<vmem>>, vector<4x16xf32>
    tpu.vector_store %arg9[%c0_26, %c289], %46 {strides = array<i32>} : memref<4x384xf32, #tpu.memory_space<vmem>>, vector<4x16xf32>,
    %c0_27 = arith.constant 0 : index
    %c0_28 = arith.constant 0 : index
    %48 = vector.load %arg9[%c0_27, %c0_28] : memref<4x384xf32, #tpu.memory_space<vmem>>, vector<4x384xf32>
    %49 = vector.extract_strided_slice %48 {offsets = [0, 0], sizes = [4, 288], strides = [1, 1]} : vector<4x384xf32> to vector<4x288xf32>
    %50 = vector.extract_strided_slice %48 {offsets = [0, 1], sizes = [4, 288], strides = [1, 1]} : vector<4x384xf32> to vector<4x288xf32>
    %51 = vector.extract_strided_slice %48 {offsets = [0, 2], sizes = [4, 288], strides = [1, 1]} : vector<4x384xf32> to vector<4x288xf32>
    %52 = vector.extract_strided_slice %48 {offsets = [0, 18], sizes = [4, 288], strides = [1, 1]} : vector<4x384xf32> to vector<4x288xf32>
    %53 = vector.extract_strided_slice %48 {offsets = [0, 19], sizes = [4, 288], strides = [1, 1]} : vector<4x384xf32> to vector<4x288xf32>
    %54 = vector.extract_strided_slice %48 {offsets = [0, 20], sizes = [4, 288], strides = [1, 1]} : vector<4x384xf32> to vector<4x288xf32>
    %55 = vector.extract_strided_slice %48 {offsets = [0, 36], sizes = [4, 288], strides = [1, 1]} : vector<4x384xf32> to vector<4x288xf32>
    %56 = vector.extract_strided_slice %48 {offsets = [0, 37], sizes = [4, 288], strides = [1, 1]} : vector<4x384xf32> to vector<4x288xf32>
    %57 = vector.extract_strided_slice %48 {offsets = [0, 38], sizes = [4, 288], strides = [1, 1]} : vector<4x384xf32> to vector<4x288xf32>
    %58 = tpu.concatenate %49, %50, %51, %52, %53, %54, %55, %56, %57 in 0 : vector<4x288xf32>, vector<4x288xf32>, vector<4x288xf32>, vector<4x288xf32>, vector<4x288xf32>, vector<4x288xf32>, vector<4x288xf32>, vector<4x288xf32>, vector<4x288xf32> -> vector<36x288xf32>
    %c0_29 = arith.constant 0 : index
    %c0_30 = arith.constant 0 : index
    %59 = vector.load %arg4[%c0_29, %c0_30] : memref<16x36xf32, #tpu.memory_space<vmem>>, vector<16x36xf32>
    %60 = arith.truncf %59 : vector<16x36xf32> to vector<16x36xbf16>
    %61 = arith.truncf %58 : vector<36x288xf32> to vector<36x288xbf16>
    %cst_31 = arith.constant dense<0.000000e+00> : vector<16x288xf32>
    %62 = tpu.matmul %60, %61, %cst_31 {dimension_numbers = #tpu.dot_dimension_numbers<[1], [0], [0], [1], [0, 0, 1, 1], [], []>} : vector<16x36xbf16>, vector<36x288xbf16>, vector<16x288xf32> -> vector<16x288xf32>
    %c0_32 = arith.constant 0 : index
    %c0_33 = arith.constant 0 : index
    %63 = vector.load %arg5[%c0_32, %c0_33] : memref<16x1xf32, #tpu.memory_space<vmem>>, vector<16x1xf32>
    %64 = vector.broadcast %63 : vector<16x1xf32> to vector<16x288xf32>
    %65 = arith.addf %62, %64 : vector<16x288xf32>
    %cst_34 = arith.constant 0.000000e+00 : f32
    %66 = vector.broadcast %cst_34 : f32 to vector<16x288xf32>
    %67 = arith.maximumf %65, %66 : vector<16x288xf32>
    %cst_35 = arith.constant 0.000000e+00 : f32
    %68 = vector.broadcast %cst_35 : f32 to vector<16x384xf32>
    %c0_36 = arith.constant 0 : index
    %c0_37 = arith.constant 0 : index
    %69 = vector.load %arg10[%c0_36, %c0_37] : memref<16x384xf32, #tpu.memory_space<vmem>>, vector<16x384xf32>
    tpu.vector_store %arg10[%c0_36, %c0_37], %68 {strides = array<i32>} : memref<16x384xf32, #tpu.memory_space<vmem>>, vector<16x384xf32>,
    %70 = vector.extract_strided_slice %67 {offsets = [0, 0], sizes = [16, 16], strides = [1, 1]} : vector<16x288xf32> to vector<16x16xf32>
    %c0_38 = arith.constant 0 : index
    %c19_39 = arith.constant 19 : index
    %71 = vector.load %arg10[%c0_38, %c19_39] : memref<16x384xf32, #tpu.memory_space<vmem>>, vector<16x16xf32>
    tpu.vector_store %arg10[%c0_38, %c19_39], %70 {strides = array<i32>} : memref<16x384xf32, #tpu.memory_space<vmem>>, vector<16x16xf32>,
    %72 = vector.extract_strided_slice %67 {offsets = [0, 18], sizes = [16, 16], strides = [1, 1]} : vector<16x288xf32> to vector<16x16xf32>
    %c0_40 = arith.constant 0 : index
    %c37_41 = arith.constant 37 : index
    %73 = vector.load %arg10[%c0_40, %c37_41] : memref<16x384xf32, #tpu.memory_space<vmem>>, vector<16x16xf32>
    tpu.vector_store %arg10[%c0_40, %c37_41], %72 {strides = array<i32>} : memref<16x384xf32, #tpu.memory_space<vmem>>, vector<16x16xf32>,
    %74 = vector.extract_strided_slice %67 {offsets = [0, 36], sizes = [16, 16], strides = [1, 1]} : vector<16x288xf32> to vector<16x16xf32>
    %c0_42 = arith.constant 0 : index
    %c55_43 = arith.constant 55 : index
    %75 = vector.load %arg10[%c0_42, %c55_43] : memref<16x384xf32, #tpu.memory_space<vmem>>, vector<16x16xf32>
    tpu.vector_store %arg10[%c0_42, %c55_43], %74 {strides = array<i32>} : memref<16x384xf32, #tpu.memory_space<vmem>>, vector<16x16xf32>,
    %76 = vector.extract_strided_slice %67 {offsets = [0, 54], sizes = [16, 16], strides = [1, 1]} : vector<16x288xf32> to vector<16x16xf32>
    %c0_44 = arith.constant 0 : index
    %c73_45 = arith.constant 73 : index
    %77 = vector.load %arg10[%c0_44, %c73_45] : memref<16x384xf32, #tpu.memory_space<vmem>>, vector<16x16xf32>
    tpu.vector_store %arg10[%c0_44, %c73_45], %76 {strides = array<i32>} : memref<16x384xf32, #tpu.memory_space<vmem>>, vector<16x16xf32>,
    %78 = vector.extract_strided_slice %67 {offsets = [0, 72], sizes = [16, 16], strides = [1, 1]} : vector<16x288xf32> to vector<16x16xf32>
    %c0_46 = arith.constant 0 : index
    %c91_47 = arith.constant 91 : index
    %79 = vector.load %arg10[%c0_46, %c91_47] : memref<16x384xf32, #tpu.memory_space<vmem>>, vector<16x16xf32>
    tpu.vector_store %arg10[%c0_46, %c91_47], %78 {strides = array<i32>} : memref<16x384xf32, #tpu.memory_space<vmem>>, vector<16x16xf32>,
    %80 = vector.extract_strided_slice %67 {offsets = [0, 90], sizes = [16, 16], strides = [1, 1]} : vector<16x288xf32> to vector<16x16xf32>
    %c0_48 = arith.constant 0 : index
    %c109_49 = arith.constant 109 : index
    %81 = vector.load %arg10[%c0_48, %c109_49] : memref<16x384xf32, #tpu.memory_space<vmem>>, vector<16x16xf32>
    tpu.vector_store %arg10[%c0_48, %c109_49], %80 {strides = array<i32>} : memref<16x384xf32, #tpu.memory_space<vmem>>, vector<16x16xf32>,
    %82 = vector.extract_strided_slice %67 {offsets = [0, 108], sizes = [16, 16], strides = [1, 1]} : vector<16x288xf32> to vector<16x16xf32>
    %c0_50 = arith.constant 0 : index
    %c127_51 = arith.constant 127 : index
    %83 = vector.load %arg10[%c0_50, %c127_51] : memref<16x384xf32, #tpu.memory_space<vmem>>, vector<16x16xf32>
    tpu.vector_store %arg10[%c0_50, %c127_51], %82 {strides = array<i32>} : memref<16x384xf32, #tpu.memory_space<vmem>>, vector<16x16xf32>,
    %84 = vector.extract_strided_slice %67 {offsets = [0, 126], sizes = [16, 16], strides = [1, 1]} : vector<16x288xf32> to vector<16x16xf32>
    %c0_52 = arith.constant 0 : index
    %c145_53 = arith.constant 145 : index
    %85 = vector.load %arg10[%c0_52, %c145_53] : memref<16x384xf32, #tpu.memory_space<vmem>>, vector<16x16xf32>
    tpu.vector_store %arg10[%c0_52, %c145_53], %84 {strides = array<i32>} : memref<16x384xf32, #tpu.memory_space<vmem>>, vector<16x16xf32>,
    %86 = vector.extract_strided_slice %67 {offsets = [0, 144], sizes = [16, 16], strides = [1, 1]} : vector<16x288xf32> to vector<16x16xf32>
    %c0_54 = arith.constant 0 : index
    %c163_55 = arith.constant 163 : index
    %87 = vector.load %arg10[%c0_54, %c163_55] : memref<16x384xf32, #tpu.memory_space<vmem>>, vector<16x16xf32>
    tpu.vector_store %arg10[%c0_54, %c163_55], %86 {strides = array<i32>} : memref<16x384xf32, #tpu.memory_space<vmem>>, vector<16x16xf32>,
    %88 = vector.extract_strided_slice %67 {offsets = [0, 162], sizes = [16, 16], strides = [1, 1]} : vector<16x288xf32> to vector<16x16xf32>
    %c0_56 = arith.constant 0 : index
    %c181_57 = arith.constant 181 : index
    %89 = vector.load %arg10[%c0_56, %c181_57] : memref<16x384xf32, #tpu.memory_space<vmem>>, vector<16x16xf32>
    tpu.vector_store %arg10[%c0_56, %c181_57], %88 {strides = array<i32>} : memref<16x384xf32, #tpu.memory_space<vmem>>, vector<16x16xf32>,
    %90 = vector.extract_strided_slice %67 {offsets = [0, 180], sizes = [16, 16], strides = [1, 1]} : vector<16x288xf32> to vector<16x16xf32>
    %c0_58 = arith.constant 0 : index
    %c199_59 = arith.constant 199 : index
    %91 = vector.load %arg10[%c0_58, %c199_59] : memref<16x384xf32, #tpu.memory_space<vmem>>, vector<16x16xf32>
    tpu.vector_store %arg10[%c0_58, %c199_59], %90 {strides = array<i32>} : memref<16x384xf32, #tpu.memory_space<vmem>>, vector<16x16xf32>,
    %92 = vector.extract_strided_slice %67 {offsets = [0, 198], sizes = [16, 16], strides = [1, 1]} : vector<16x288xf32> to vector<16x16xf32>
    %c0_60 = arith.constant 0 : index
    %c217_61 = arith.constant 217 : index
    %93 = vector.load %arg10[%c0_60, %c217_61] : memref<16x384xf32, #tpu.memory_space<vmem>>, vector<16x16xf32>
    tpu.vector_store %arg10[%c0_60, %c217_61], %92 {strides = array<i32>} : memref<16x384xf32, #tpu.memory_space<vmem>>, vector<16x16xf32>,
    %94 = vector.extract_strided_slice %67 {offsets = [0, 216], sizes = [16, 16], strides = [1, 1]} : vector<16x288xf32> to vector<16x16xf32>
    %c0_62 = arith.constant 0 : index
    %c235_63 = arith.constant 235 : index
    %95 = vector.load %arg10[%c0_62, %c235_63] : memref<16x384xf32, #tpu.memory_space<vmem>>, vector<16x16xf32>
    tpu.vector_store %arg10[%c0_62, %c235_63], %94 {strides = array<i32>} : memref<16x384xf32, #tpu.memory_space<vmem>>, vector<16x16xf32>,
    %96 = vector.extract_strided_slice %67 {offsets = [0, 234], sizes = [16, 16], strides = [1, 1]} : vector<16x288xf32> to vector<16x16xf32>
    %c0_64 = arith.constant 0 : index
    %c253_65 = arith.constant 253 : index
    %97 = vector.load %arg10[%c0_64, %c253_65] : memref<16x384xf32, #tpu.memory_space<vmem>>, vector<16x16xf32>
    tpu.vector_store %arg10[%c0_64, %c253_65], %96 {strides = array<i32>} : memref<16x384xf32, #tpu.memory_space<vmem>>, vector<16x16xf32>,
    %98 = vector.extract_strided_slice %67 {offsets = [0, 252], sizes = [16, 16], strides = [1, 1]} : vector<16x288xf32> to vector<16x16xf32>
    %c0_66 = arith.constant 0 : index
    %c271_67 = arith.constant 271 : index
    %99 = vector.load %arg10[%c0_66, %c271_67] : memref<16x384xf32, #tpu.memory_space<vmem>>, vector<16x16xf32>
    tpu.vector_store %arg10[%c0_66, %c271_67], %98 {strides = array<i32>} : memref<16x384xf32, #tpu.memory_space<vmem>>, vector<16x16xf32>,
    %100 = vector.extract_strided_slice %67 {offsets = [0, 270], sizes = [16, 16], strides = [1, 1]} : vector<16x288xf32> to vector<16x16xf32>
    %c0_68 = arith.constant 0 : index
    %c289_69 = arith.constant 289 : index
    %101 = vector.load %arg10[%c0_68, %c289_69] : memref<16x384xf32, #tpu.memory_space<vmem>>, vector<16x16xf32>
    tpu.vector_store %arg10[%c0_68, %c289_69], %100 {strides = array<i32>} : memref<16x384xf32, #tpu.memory_space<vmem>>, vector<16x16xf32>,
    %c0_70 = arith.constant 0 : index
    %c0_71 = arith.constant 0 : index
    %102 = vector.load %arg10[%c0_70, %c0_71] : memref<16x384xf32, #tpu.memory_space<vmem>>, vector<16x384xf32>
    %103 = vector.extract_strided_slice %102 {offsets = [0, 0], sizes = [16, 288], strides = [1, 1]} : vector<16x384xf32> to vector<16x288xf32>
    %104 = vector.extract_strided_slice %102 {offsets = [0, 1], sizes = [16, 288], strides = [1, 1]} : vector<16x384xf32> to vector<16x288xf32>
    %105 = vector.extract_strided_slice %102 {offsets = [0, 2], sizes = [16, 288], strides = [1, 1]} : vector<16x384xf32> to vector<16x288xf32>
    %106 = vector.extract_strided_slice %102 {offsets = [0, 18], sizes = [16, 288], strides = [1, 1]} : vector<16x384xf32> to vector<16x288xf32>
    %107 = vector.extract_strided_slice %102 {offsets = [0, 19], sizes = [16, 288], strides = [1, 1]} : vector<16x384xf32> to vector<16x288xf32>
    %108 = vector.extract_strided_slice %102 {offsets = [0, 20], sizes = [16, 288], strides = [1, 1]} : vector<16x384xf32> to vector<16x288xf32>
    %109 = vector.extract_strided_slice %102 {offsets = [0, 36], sizes = [16, 288], strides = [1, 1]} : vector<16x384xf32> to vector<16x288xf32>
    %110 = vector.extract_strided_slice %102 {offsets = [0, 37], sizes = [16, 288], strides = [1, 1]} : vector<16x384xf32> to vector<16x288xf32>
    %111 = vector.extract_strided_slice %102 {offsets = [0, 38], sizes = [16, 288], strides = [1, 1]} : vector<16x384xf32> to vector<16x288xf32>
    %112 = tpu.concatenate %103, %104, %105, %106, %107, %108, %109, %110, %111 in 0 : vector<16x288xf32>, vector<16x288xf32>, vector<16x288xf32>, vector<16x288xf32>, vector<16x288xf32>, vector<16x288xf32>, vector<16x288xf32>, vector<16x288xf32>, vector<16x288xf32> -> vector<144x288xf32>
    %c0_72 = arith.constant 0 : index
    %c0_73 = arith.constant 0 : index
    %113 = vector.load %arg6[%c0_72, %c0_73] : memref<3x144xf32, #tpu.memory_space<vmem>>, vector<3x144xf32>
    %114 = arith.truncf %113 : vector<3x144xf32> to vector<3x144xbf16>
    %115 = arith.truncf %112 : vector<144x288xf32> to vector<144x288xbf16>
    %cst_74 = arith.constant dense<0.000000e+00> : vector<3x288xf32>
    %116 = tpu.matmul %114, %115, %cst_74 {dimension_numbers = #tpu.dot_dimension_numbers<[1], [0], [0], [1], [0, 0, 1, 1], [], []>} : vector<3x144xbf16>, vector<144x288xbf16>, vector<3x288xf32> -> vector<3x288xf32>
    %c0_75 = arith.constant 0 : index
    %c0_76 = arith.constant 0 : index
    %117 = vector.load %arg7[%c0_75, %c0_76] : memref<3x1xf32, #tpu.memory_space<vmem>>, vector<3x1xf32>
    %118 = vector.broadcast %117 : vector<3x1xf32> to vector<3x288xf32>
    %119 = arith.addf %116, %118 : vector<3x288xf32>
    %120 = arith.negf %119 : vector<3x288xf32>
    %121 = math.exp %120 : vector<3x288xf32>
    %cst_77 = arith.constant 1.000000e+00 : f32
    %122 = vector.broadcast %cst_77 : f32 to vector<3x288xf32>
    %123 = arith.addf %122, %121 : vector<3x288xf32>
    %124 = arith.divf %122, %123 : vector<3x288xf32>
    %125 = vector.extract_strided_slice %124 {offsets = [0, 0], sizes = [3, 16], strides = [1, 1]} : vector<3x288xf32> to vector<3x16xf32>
    %c0_78 = arith.constant 0 : index
    %c0_79 = arith.constant 0 : index
    %c0_80 = arith.constant 0 : index
    %126 = vector.load %arg8[%c0_78, %c0_79, %c0_80] : memref<1x3x256xf32, #tpu.memory_space<vmem>>, vector<1x3x16xf32>
    %127 = vector.shape_cast %126 : vector<1x3x16xf32> to vector<3x16xf32>
    %128 = vector.shape_cast %125 : vector<3x16xf32> to vector<1x3x16xf32>
    tpu.vector_store %arg8[%c0_78, %c0_79, %c0_80], %128 {strides = array<i32>} : memref<1x3x256xf32, #tpu.memory_space<vmem>>, vector<1x3x16xf32>,
    %129 = vector.extract_strided_slice %124 {offsets = [0, 18], sizes = [3, 16], strides = [1, 1]} : vector<3x288xf32> to vector<3x16xf32>
    %c0_81 = arith.constant 0 : index
    %c0_82 = arith.constant 0 : index
    %c16 = arith.constant 16 : index
    %130 = vector.load %arg8[%c0_81, %c0_82, %c16] : memref<1x3x256xf32, #tpu.memory_space<vmem>>, vector<1x3x16xf32>
    %131 = vector.shape_cast %130 : vector<1x3x16xf32> to vector<3x16xf32>
    %132 = vector.shape_cast %129 : vector<3x16xf32> to vector<1x3x16xf32>
    tpu.vector_store %arg8[%c0_81, %c0_82, %c16], %132 {strides = array<i32>} : memref<1x3x256xf32, #tpu.memory_space<vmem>>, vector<1x3x16xf32>,
    %133 = vector.extract_strided_slice %124 {offsets = [0, 36], sizes = [3, 16], strides = [1, 1]} : vector<3x288xf32> to vector<3x16xf32>
    %c0_83 = arith.constant 0 : index
    %c0_84 = arith.constant 0 : index
    %c32 = arith.constant 32 : index
    %134 = vector.load %arg8[%c0_83, %c0_84, %c32] : memref<1x3x256xf32, #tpu.memory_space<vmem>>, vector<1x3x16xf32>
    %135 = vector.shape_cast %134 : vector<1x3x16xf32> to vector<3x16xf32>
    %136 = vector.shape_cast %133 : vector<3x16xf32> to vector<1x3x16xf32>
    tpu.vector_store %arg8[%c0_83, %c0_84, %c32], %136 {strides = array<i32>} : memref<1x3x256xf32, #tpu.memory_space<vmem>>, vector<1x3x16xf32>,
    %137 = vector.extract_strided_slice %124 {offsets = [0, 54], sizes = [3, 16], strides = [1, 1]} : vector<3x288xf32> to vector<3x16xf32>
    %c0_85 = arith.constant 0 : index
    %c0_86 = arith.constant 0 : index
    %c48 = arith.constant 48 : index
    %138 = vector.load %arg8[%c0_85, %c0_86, %c48] : memref<1x3x256xf32, #tpu.memory_space<vmem>>, vector<1x3x16xf32>
    %139 = vector.shape_cast %138 : vector<1x3x16xf32> to vector<3x16xf32>
    %140 = vector.shape_cast %137 : vector<3x16xf32> to vector<1x3x16xf32>
    tpu.vector_store %arg8[%c0_85, %c0_86, %c48], %140 {strides = array<i32>} : memref<1x3x256xf32, #tpu.memory_space<vmem>>, vector<1x3x16xf32>,
    %141 = vector.extract_strided_slice %124 {offsets = [0, 72], sizes = [3, 16], strides = [1, 1]} : vector<3x288xf32> to vector<3x16xf32>
    %c0_87 = arith.constant 0 : index
    %c0_88 = arith.constant 0 : index
    %c64 = arith.constant 64 : index
    %142 = vector.load %arg8[%c0_87, %c0_88, %c64] : memref<1x3x256xf32, #tpu.memory_space<vmem>>, vector<1x3x16xf32>
    %143 = vector.shape_cast %142 : vector<1x3x16xf32> to vector<3x16xf32>
    %144 = vector.shape_cast %141 : vector<3x16xf32> to vector<1x3x16xf32>
    tpu.vector_store %arg8[%c0_87, %c0_88, %c64], %144 {strides = array<i32>} : memref<1x3x256xf32, #tpu.memory_space<vmem>>, vector<1x3x16xf32>,
    %145 = vector.extract_strided_slice %124 {offsets = [0, 90], sizes = [3, 16], strides = [1, 1]} : vector<3x288xf32> to vector<3x16xf32>
    %c0_89 = arith.constant 0 : index
    %c0_90 = arith.constant 0 : index
    %c80 = arith.constant 80 : index
    %146 = vector.load %arg8[%c0_89, %c0_90, %c80] : memref<1x3x256xf32, #tpu.memory_space<vmem>>, vector<1x3x16xf32>
    %147 = vector.shape_cast %146 : vector<1x3x16xf32> to vector<3x16xf32>
    %148 = vector.shape_cast %145 : vector<3x16xf32> to vector<1x3x16xf32>
    tpu.vector_store %arg8[%c0_89, %c0_90, %c80], %148 {strides = array<i32>} : memref<1x3x256xf32, #tpu.memory_space<vmem>>, vector<1x3x16xf32>,
    %149 = vector.extract_strided_slice %124 {offsets = [0, 108], sizes = [3, 16], strides = [1, 1]} : vector<3x288xf32> to vector<3x16xf32>
    %c0_91 = arith.constant 0 : index
    %c0_92 = arith.constant 0 : index
    %c96 = arith.constant 96 : index
    %150 = vector.load %arg8[%c0_91, %c0_92, %c96] : memref<1x3x256xf32, #tpu.memory_space<vmem>>, vector<1x3x16xf32>
    %151 = vector.shape_cast %150 : vector<1x3x16xf32> to vector<3x16xf32>
    %152 = vector.shape_cast %149 : vector<3x16xf32> to vector<1x3x16xf32>
    tpu.vector_store %arg8[%c0_91, %c0_92, %c96], %152 {strides = array<i32>} : memref<1x3x256xf32, #tpu.memory_space<vmem>>, vector<1x3x16xf32>,
    %153 = vector.extract_strided_slice %124 {offsets = [0, 126], sizes = [3, 16], strides = [1, 1]} : vector<3x288xf32> to vector<3x16xf32>
    %c0_93 = arith.constant 0 : index
    %c0_94 = arith.constant 0 : index
    %c112 = arith.constant 112 : index
    %154 = vector.load %arg8[%c0_93, %c0_94, %c112] : memref<1x3x256xf32, #tpu.memory_space<vmem>>, vector<1x3x16xf32>
    %155 = vector.shape_cast %154 : vector<1x3x16xf32> to vector<3x16xf32>
    %156 = vector.shape_cast %153 : vector<3x16xf32> to vector<1x3x16xf32>
    tpu.vector_store %arg8[%c0_93, %c0_94, %c112], %156 {strides = array<i32>} : memref<1x3x256xf32, #tpu.memory_space<vmem>>, vector<1x3x16xf32>,
    %157 = vector.extract_strided_slice %124 {offsets = [0, 144], sizes = [3, 16], strides = [1, 1]} : vector<3x288xf32> to vector<3x16xf32>
    %c0_95 = arith.constant 0 : index
    %c0_96 = arith.constant 0 : index
    %c128 = arith.constant 128 : index
    %158 = vector.load %arg8[%c0_95, %c0_96, %c128] : memref<1x3x256xf32, #tpu.memory_space<vmem>>, vector<1x3x16xf32>
    %159 = vector.shape_cast %158 : vector<1x3x16xf32> to vector<3x16xf32>
    %160 = vector.shape_cast %157 : vector<3x16xf32> to vector<1x3x16xf32>
    tpu.vector_store %arg8[%c0_95, %c0_96, %c128], %160 {strides = array<i32>} : memref<1x3x256xf32, #tpu.memory_space<vmem>>, vector<1x3x16xf32>,
    %161 = vector.extract_strided_slice %124 {offsets = [0, 162], sizes = [3, 16], strides = [1, 1]} : vector<3x288xf32> to vector<3x16xf32>
    %c0_97 = arith.constant 0 : index
    %c0_98 = arith.constant 0 : index
    %c144 = arith.constant 144 : index
    %162 = vector.load %arg8[%c0_97, %c0_98, %c144] : memref<1x3x256xf32, #tpu.memory_space<vmem>>, vector<1x3x16xf32>
    %163 = vector.shape_cast %162 : vector<1x3x16xf32> to vector<3x16xf32>
    %164 = vector.shape_cast %161 : vector<3x16xf32> to vector<1x3x16xf32>
    tpu.vector_store %arg8[%c0_97, %c0_98, %c144], %164 {strides = array<i32>} : memref<1x3x256xf32, #tpu.memory_space<vmem>>, vector<1x3x16xf32>,
    %165 = vector.extract_strided_slice %124 {offsets = [0, 180], sizes = [3, 16], strides = [1, 1]} : vector<3x288xf32> to vector<3x16xf32>
    %c0_99 = arith.constant 0 : index
    %c0_100 = arith.constant 0 : index
    %c160 = arith.constant 160 : index
    %166 = vector.load %arg8[%c0_99, %c0_100, %c160] : memref<1x3x256xf32, #tpu.memory_space<vmem>>, vector<1x3x16xf32>
    %167 = vector.shape_cast %166 : vector<1x3x16xf32> to vector<3x16xf32>
    %168 = vector.shape_cast %165 : vector<3x16xf32> to vector<1x3x16xf32>
    tpu.vector_store %arg8[%c0_99, %c0_100, %c160], %168 {strides = array<i32>} : memref<1x3x256xf32, #tpu.memory_space<vmem>>, vector<1x3x16xf32>,
    %169 = vector.extract_strided_slice %124 {offsets = [0, 198], sizes = [3, 16], strides = [1, 1]} : vector<3x288xf32> to vector<3x16xf32>
    %c0_101 = arith.constant 0 : index
    %c0_102 = arith.constant 0 : index
    %c176 = arith.constant 176 : index
    %170 = vector.load %arg8[%c0_101, %c0_102, %c176] : memref<1x3x256xf32, #tpu.memory_space<vmem>>, vector<1x3x16xf32>
    %171 = vector.shape_cast %170 : vector<1x3x16xf32> to vector<3x16xf32>
    %172 = vector.shape_cast %169 : vector<3x16xf32> to vector<1x3x16xf32>
    tpu.vector_store %arg8[%c0_101, %c0_102, %c176], %172 {strides = array<i32>} : memref<1x3x256xf32, #tpu.memory_space<vmem>>, vector<1x3x16xf32>,
    %173 = vector.extract_strided_slice %124 {offsets = [0, 216], sizes = [3, 16], strides = [1, 1]} : vector<3x288xf32> to vector<3x16xf32>
    %c0_103 = arith.constant 0 : index
    %c0_104 = arith.constant 0 : index
    %c192 = arith.constant 192 : index
    %174 = vector.load %arg8[%c0_103, %c0_104, %c192] : memref<1x3x256xf32, #tpu.memory_space<vmem>>, vector<1x3x16xf32>
    %175 = vector.shape_cast %174 : vector<1x3x16xf32> to vector<3x16xf32>
    %176 = vector.shape_cast %173 : vector<3x16xf32> to vector<1x3x16xf32>
    tpu.vector_store %arg8[%c0_103, %c0_104, %c192], %176 {strides = array<i32>} : memref<1x3x256xf32, #tpu.memory_space<vmem>>, vector<1x3x16xf32>,
    %177 = vector.extract_strided_slice %124 {offsets = [0, 234], sizes = [3, 16], strides = [1, 1]} : vector<3x288xf32> to vector<3x16xf32>
    %c0_105 = arith.constant 0 : index
    %c0_106 = arith.constant 0 : index
    %c208 = arith.constant 208 : index
    %178 = vector.load %arg8[%c0_105, %c0_106, %c208] : memref<1x3x256xf32, #tpu.memory_space<vmem>>, vector<1x3x16xf32>
    %179 = vector.shape_cast %178 : vector<1x3x16xf32> to vector<3x16xf32>
    %180 = vector.shape_cast %177 : vector<3x16xf32> to vector<1x3x16xf32>
    tpu.vector_store %arg8[%c0_105, %c0_106, %c208], %180 {strides = array<i32>} : memref<1x3x256xf32, #tpu.memory_space<vmem>>, vector<1x3x16xf32>,
    %181 = vector.extract_strided_slice %124 {offsets = [0, 252], sizes = [3, 16], strides = [1, 1]} : vector<3x288xf32> to vector<3x16xf32>
    %c0_107 = arith.constant 0 : index
    %c0_108 = arith.constant 0 : index
    %c224 = arith.constant 224 : index
    %182 = vector.load %arg8[%c0_107, %c0_108, %c224] : memref<1x3x256xf32, #tpu.memory_space<vmem>>, vector<1x3x16xf32>
    %183 = vector.shape_cast %182 : vector<1x3x16xf32> to vector<3x16xf32>
    %184 = vector.shape_cast %181 : vector<3x16xf32> to vector<1x3x16xf32>
    tpu.vector_store %arg8[%c0_107, %c0_108, %c224], %184 {strides = array<i32>} : memref<1x3x256xf32, #tpu.memory_space<vmem>>, vector<1x3x16xf32>,
    %185 = vector.extract_strided_slice %124 {offsets = [0, 270], sizes = [3, 16], strides = [1, 1]} : vector<3x288xf32> to vector<3x16xf32>
    %c0_109 = arith.constant 0 : index
    %c0_110 = arith.constant 0 : index
    %c240 = arith.constant 240 : index
    %186 = vector.load %arg8[%c0_109, %c0_110, %c240] : memref<1x3x256xf32, #tpu.memory_space<vmem>>, vector<1x3x16xf32>
    %187 = vector.shape_cast %186 : vector<1x3x16xf32> to vector<3x16xf32>
    %188 = vector.shape_cast %185 : vector<3x16xf32> to vector<1x3x16xf32>
    tpu.vector_store %arg8[%c0_109, %c0_110, %c240], %188 {strides = array<i32>} : memref<1x3x256xf32, #tpu.memory_space<vmem>>, vector<1x3x16xf32>,
    return
  }
  func.func @transform_0(%arg0: i32) -> (i32, i32, i32) {
    %c0_i32 = arith.constant 0 : i32
    %c0_i32_0 = arith.constant 0 : i32
    %c0_i32_1 = arith.constant 0 : i32
    return %arg0, %c0_i32, %c0_i32_0 : i32, i32, i32
  }
  func.func @transform_1(%arg0: i32) -> (i32, i32, i32) {
    %c0_i32 = arith.constant 0 : i32
    %c0_i32_0 = arith.constant 0 : i32
    %c0_i32_1 = arith.constant 0 : i32
    return %arg0, %c0_i32, %c0_i32_0 : i32, i32, i32
  }
  func.func @transform_2(%arg0: i32) -> (i32, i32, i32) {
    %c0_i32 = arith.constant 0 : i32
    %c0_i32_0 = arith.constant 0 : i32
    %c0_i32_1 = arith.constant 0 : i32
    return %arg0, %c0_i32, %c0_i32_0 : i32, i32, i32
  }
  func.func @transform_3(%arg0: i32) -> (i32, i32) {
    %c0_i32 = arith.constant 0 : i32
    %c0_i32_0 = arith.constant 0 : i32
    %c0_i32_1 = arith.constant 0 : i32
    return %c0_i32, %c0_i32_0 : i32, i32
  }
  func.func @transform_4(%arg0: i32) -> (i32, i32) {
    %c0_i32 = arith.constant 0 : i32
    %c0_i32_0 = arith.constant 0 : i32
    %c0_i32_1 = arith.constant 0 : i32
    return %c0_i32, %c0_i32_0 : i32, i32
  }
  func.func @transform_5(%arg0: i32) -> (i32, i32) {
    %c0_i32 = arith.constant 0 : i32
    %c0_i32_0 = arith.constant 0 : i32
    %c0_i32_1 = arith.constant 0 : i32
    return %c0_i32, %c0_i32_0 : i32, i32
  }
  func.func @transform_6(%arg0: i32) -> (i32, i32) {
    %c0_i32 = arith.constant 0 : i32
    %c0_i32_0 = arith.constant 0 : i32
    %c0_i32_1 = arith.constant 0 : i32
    return %c0_i32, %c0_i32_0 : i32, i32
  }
  func.func @transform_7(%arg0: i32) -> (i32, i32, i32) {
    %c0_i32 = arith.constant 0 : i32
    %c0_i32_0 = arith.constant 0 : i32
    %c0_i32_1 = arith.constant 0 : i32
    return %arg0, %c0_i32, %c0_i32_0 : i32, i32, i32
  }
}

</mosaic_0001>

<llo_original>
// kernel: refine_forward.1
$region0: #{refine_forward.1}
  #allocation0 [shape = 'u32[]', space=smem, size = 0x4, offset = 0x4, fixed_abs, tag = 'smem constant byte address 0x4 - core index']
  #allocation1 [shape = 'u32[144,128]{1,0:T(1,128)}', space=vmem, size = 0x12000, scoped, tag = 'internal scratch']
  #allocation2 [shape = 'f32[4,384]{1,0:T(4,128)}', space=vmem, size = 0x1800, scoped, tag = 'scratch operand']
  #allocation3 [shape = 'f32[16,384]{1,0:T(8,128)}', space=vmem, size = 0x6000, scoped, tag = 'scratch operand']
  %s0 = inlined_call_operand.vmem [shape: f32[2,3,256], index: 0, kind: input, shape index: {}]
  %s1 = inlined_call_operand.vmem [shape: f32[2,3,256], index: 1, kind: input, shape index: {}]
  %s2 = inlined_call_operand.vmem [shape: f32[2,1,256], index: 2, kind: input, shape index: {}]
  %s3 = inlined_call_operand.vmem [shape: f32[16,36], index: 3, kind: input, shape index: {}]
  %s4 = inlined_call_operand.vmem [shape: f32[16,1], index: 4, kind: input, shape index: {}]
  %s5 = inlined_call_operand.vmem [shape: f32[3,144], index: 5, kind: input, shape index: {}]
  %s6 = inlined_call_operand.vmem [shape: f32[3,1], index: 6, kind: input, shape index: {}]
  %s7 = inlined_call_operand.vmem [shape: f32[2,3,256], index: 7, kind: output, shape index: {}]
  %s8 = sld [smem:[#allocation0]]
  $region61: #{refine_forward.1} parent=0
    _
  %s10 = ssub.s32 1, %s8
  %s11 = scalar_select 0, %s10, %s8
  loop: start=0, step=1, limit=4
  $region2: #{refine_forward.1} parent=0 // loop_pre_header
    _
  $region3: #{refine_forward.1} parent=0 // loop_header
    %s13 = sphi 0, %s17
    %p14 = scmp.ge.s32.totalorder %s13, 4
    %s23 = sphi 0, %s25
    %s26 = sphi 0, %s23
    %s27 = sphi 0, %s26
    %s43 = sphi 0, %s27
    %s49 = sphi 0, %s51
    %s52 = sphi 0, %s49
    %s53 = sphi 0, %s52
    %s69 = sphi 0, %s53
    %s75 = sphi 0, %s77
    %s78 = sphi 0, %s75
    %s79 = sphi 0, %s78
    %s95 = sphi 0, %s79
    %s99 = sphi 0, %s99
    %s101 = sphi 0, %s99
    %s102 = sphi 0, %s101
    %s116 = sphi 0, %s102
    %s120 = sphi 0, %s120
    %s122 = sphi 0, %s120
    %s123 = sphi 0, %s122
    %s137 = sphi 0, %s123
    %s141 = sphi 0, %s141
    %s143 = sphi 0, %s141
    %s144 = sphi 0, %s143
    %s158 = sphi 0, %s144
    %s162 = sphi 0, %s162
    %s164 = sphi 0, %s162
    %s165 = sphi 0, %s164
    %s179 = sphi 0, %s165
    %s185 = sphi 0, %s187
    %s188 = sphi 0, %s185
    %s189 = sphi 0, %s188
    %s205 = sphi 0, %s189
  $region4: #{refine_forward.1} parent=0 // loop_header_branch
    %16 = sbr.rel (%p14) target = $region8
  $region5: #{refine_forward.1} parent=0 // loop_body
    %s18 = ssub.s32 %s13, 1
    %s19 = ssub.s32 %s13, 2
    %s20 = sadd.s32 %s13, 1
    %s21 = ssub.s32 %s13, %s20
    %p22 = scmp.eq.s32.totalorder %s21, 0
    %s24 = sadd.s32 %s23, 1
    %s25 = scalar_select %p22, %s23, %s24
    %p28 = pneg %p22
    %p29 = scmp.eq.s32.totalorder %s13, 1
    %p30 = por %p28, %p29
    %p31 = scmp.ne.s32.totalorder %s23, %s26
    %p32 = scmp.eq.s32.totalorder %s13, 0
    %p33 = por %p31, %p32
    %p34 = scmp.ne.s32.totalorder %s23, %s26
    %p35 = scmp.eq.s32.totalorder %s18, 1
    %p36 = por %p34, %p35
    %p37 = scmp.ne.s32.totalorder %s26, %s27
    %p38 = scmp.eq.s32.totalorder %s18, 0
    %p39 = por %p37, %p38
    %p40 = scmp.ne.s32.totalorder %s26, %s27
    %p41 = scmp.eq.s32.totalorder %s19, 1
    %p42 = por %p40, %p41
    %p44 = scmp.ne.s32.totalorder %s27, %s43
    %p45 = scmp.eq.s32.totalorder %s19, 0
    %p46 = por %p44, %p45
    %s47 = ssub.s32 %s13, %s20
    %p48 = scmp.eq.s32.totalorder %s47, 0
    %s50 = sadd.s32 %s49, 1
    %s51 = scalar_select %p48, %s49, %s50
    %p54 = pneg %p48
    %p55 = scmp.eq.s32.totalorder %s13, 1
    %p56 = por %p54, %p55
    %p57 = scmp.ne.s32.totalorder %s49, %s52
    %p58 = scmp.eq.s32.totalorder %s13, 0
    %p59 = por %p57, %p58
    %p60 = scmp.ne.s32.totalorder %s49, %s52
    %p61 = scmp.eq.s32.totalorder %s18, 1
    %p62 = por %p60, %p61
    %p63 = scmp.ne.s32.totalorder %s52, %s53
    %p64 = scmp.eq.s32.totalorder %s18, 0
    %p65 = por %p63, %p64
    %p66 = scmp.ne.s32.totalorder %s52, %s53
    %p67 = scmp.eq.s32.totalorder %s19, 1
    %p68 = por %p66, %p67
    %p70 = scmp.ne.s32.totalorder %s53, %s69
    %p71 = scmp.eq.s32.totalorder %s19, 0
    %p72 = por %p70, %p71
    %s73 = ssub.s32 %s13, %s20
    %p74 = scmp.eq.s32.totalorder %s73, 0
    %s76 = sadd.s32 %s75, 1
    %s77 = scalar_select %p74, %s75, %s76
    %p80 = pneg %p74
    %p81 = scmp.eq.s32.totalorder %s13, 1
    %p82 = por %p80, %p81
    %p83 = scmp.ne.s32.totalorder %s75, %s78
    %p84 = scmp.eq.s32.totalorder %s13, 0
    %p85 = por %p83, %p84
    %p86 = scmp.ne.s32.totalorder %s75, %s78
    %p87 = scmp.eq.s32.totalorder %s18, 1
    %p88 = por %p86, %p87
    %p89 = scmp.ne.s32.totalorder %s78, %s79
    %p90 = scmp.eq.s32.totalorder %s18, 0
    %p91 = por %p89, %p90
    %p92 = scmp.ne.s32.totalorder %s78, %s79
    %p93 = scmp.eq.s32.totalorder %s19, 1
    %p94 = por %p92, %p93
    %p96 = scmp.ne.s32.totalorder %s79, %s95
    %p97 = scmp.eq.s32.totalorder %s19, 0
    %p98 = por %p96, %p97
    %s100 = sadd.s32 %s99, 1
    %p103 = scmp.eq.s32.totalorder %s13, 1
    %p104 = scmp.ne.s32.totalorder %s99, %s101
    %p105 = scmp.eq.s32.totalorder %s13, 0
    %p106 = por %p104, %p105
    %p107 = scmp.ne.s32.totalorder %s99, %s101
    %p108 = scmp.eq.s32.totalorder %s18, 1
    %p109 = por %p107, %p108
    %p110 = scmp.ne.s32.totalorder %s101, %s102
    %p111 = scmp.eq.s32.totalorder %s18, 0
    %p112 = por %p110, %p111
    %p113 = scmp.ne.s32.totalorder %s101, %s102
    %p114 = scmp.eq.s32.totalorder %s19, 1
    %p115 = por %p113, %p114
    %p117 = scmp.ne.s32.totalorder %s102, %s116
    %p118 = scmp.eq.s32.totalorder %s19, 0
    %p119 = por %p117, %p118
    %s121 = sadd.s32 %s120, 1
    %p124 = scmp.eq.s32.totalorder %s13, 1
    %p125 = scmp.ne.s32.totalorder %s120, %s122
    %p126 = scmp.eq.s32.totalorder %s13, 0
    %p127 = por %p125, %p126
    %p128 = scmp.ne.s32.totalorder %s120, %s122
    %p129 = scmp.eq.s32.totalorder %s18, 1
    %p130 = por %p128, %p129
    %p131 = scmp.ne.s32.totalorder %s122, %s123
    %p132 = scmp.eq.s32.totalorder %s18, 0
    %p133 = por %p131, %p132
    %p134 = scmp.ne.s32.totalorder %s122, %s123
    %p135 = scmp.eq.s32.totalorder %s19, 1
    %p136 = por %p134, %p135
    %p138 = scmp.ne.s32.totalorder %s123, %s137
    %p139 = scmp.eq.s32.totalorder %s19, 0
    %p140 = por %p138, %p139
    %s142 = sadd.s32 %s141, 1
    %p145 = scmp.eq.s32.totalorder %s13, 1
    %p146 = scmp.ne.s32.totalorder %s141, %s143
    %p147 = scmp.eq.s32.totalorder %s13, 0
    %p148 = por %p146, %p147
    %p149 = scmp.ne.s32.totalorder %s141, %s143
    %p150 = scmp.eq.s32.totalorder %s18, 1
    %p151 = por %p149, %p150
    %p152 = scmp.ne.s32.totalorder %s143, %s144
    %p153 = scmp.eq.s32.totalorder %s18, 0
    %p154 = por %p152, %p153
    %p155 = scmp.ne.s32.totalorder %s143, %s144
    %p156 = scmp.eq.s32.totalorder %s19, 1
    %p157 = por %p155, %p156
    %p159 = scmp.ne.s32.totalorder %s144, %s158
    %p160 = scmp.eq.s32.totalorder %s19, 0
    %p161 = por %p159, %p160
    %s163 = sadd.s32 %s162, 1
    %p166 = scmp.eq.s32.totalorder %s13, 1
    %p167 = scmp.ne.s32.totalorder %s162, %s164
    %p168 = scmp.eq.s32.totalorder %s13, 0
    %p169 = por %p167, %p168
    %p170 = scmp.ne.s32.totalorder %s162, %s164
    %p171 = scmp.eq.s32.totalorder %s18, 1
    %p172 = por %p170, %p171
    %p173 = scmp.ne.s32.totalorder %s164, %s165
    %p174 = scmp.eq.s32.totalorder %s18, 0
    %p175 = por %p173, %p174
    %p176 = scmp.ne.s32.totalorder %s164, %s165
    %p177 = scmp.eq.s32.totalorder %s19, 1
    %p178 = por %p176, %p177
    %p180 = scmp.ne.s32.totalorder %s165, %s179
    %p181 = scmp.eq.s32.totalorder %s19, 0
    %p182 = por %p180, %p181
    %s183 = ssub.s32 %s13, %s20
    %p184 = scmp.eq.s32.totalorder %s183, 0
    %s186 = sadd.s32 %s185, 1
    %s187 = scalar_select %p184, %s185, %s186
    %p190 = pneg %p184
    %p191 = scmp.eq.s32.totalorder %s13, 1
    %p192 = por %p190, %p191
    %p193 = scmp.ne.s32.totalorder %s185, %s188
    %p194 = scmp.eq.s32.totalorder %s13, 0
    %p195 = por %p193, %p194
    %p196 = scmp.ne.s32.totalorder %s185, %s188
    %p197 = scmp.eq.s32.totalorder %s18, 1
    %p198 = por %p196, %p197
    %p199 = scmp.ne.s32.totalorder %s188, %s189
    %p200 = scmp.eq.s32.totalorder %s18, 0
    %p201 = por %p199, %p200
    %p202 = scmp.ne.s32.totalorder %s188, %s189
    %p203 = scmp.eq.s32.totalorder %s19, 1
    %p204 = por %p202, %p203
    %p206 = scmp.ne.s32.totalorder %s189, %s205
    %p207 = scmp.eq.s32.totalorder %s19, 0
    %p208 = por %p206, %p207
    %p209 = scmp.le.s32.totalorder 1, %s13
    %p210 = scmp.lt.s32.totalorder %s13, 3
    %p211 = pnand %p209, %p210
    %p212 = pneg %p211
    // Predicated region
    $region9: #{refine_forward.1} parent=5 // pred_check
      _
    $region10: #{refine_forward.1} parent=5 // pred_check_branch
      %214 = sbr.rel (%p211) target = $region12
    $region11: #{refine_forward.1} parent=5 // pred_region
      %s215 = ssub.s32 %s13, 1
      // Predicated region
      $region13: #{refine_forward.1} parent=11 // pred_check
        %p216 = pneg %p112
      $region14: #{refine_forward.1} parent=11 // pred_check_branch
        %218 = sbr.rel (%p216) target = $region16
      $region15: #{refine_forward.1} parent=11 // pred_region
        _
      $region16: #{refine_forward.1} parent=11 // pred_fallthru
        _
      // Predicated region
      $region17: #{refine_forward.1} parent=11 // pred_check
        %p219 = pneg %p133
      $region18: #{refine_forward.1} parent=11 // pred_check_branch
        %221 = sbr.rel (%p219) target = $region20
      $region19: #{refine_forward.1} parent=11 // pred_region
        _
      $region20: #{refine_forward.1} parent=11 // pred_fallthru
        _
      // Predicated region
      $region21: #{refine_forward.1} parent=11 // pred_check
        %p222 = pneg %p154
      $region22: #{refine_forward.1} parent=11 // pred_check_branch
        %224 = sbr.rel (%p222) target = $region24
      $region23: #{refine_forward.1} parent=11 // pred_region
        _
      $region24: #{refine_forward.1} parent=11 // pred_fallthru
        _
      // Predicated region
      $region25: #{refine_forward.1} parent=11 // pred_check
        %p225 = pneg %p175
      $region26: #{refine_forward.1} parent=11 // pred_check_branch
        %227 = sbr.rel (%p225) target = $region28
      $region27: #{refine_forward.1} parent=11 // pred_region
        _
      $region28: #{refine_forward.1} parent=11 // pred_fallthru
        _
    $region12: #{refine_forward.1} parent=5 // pred_fallthru
      _
    %p228 = scmp.lt.s32.totalorder %s13, 2
    // Predicated region
    $region29: #{refine_forward.1} parent=5 // pred_check
      %p229 = pneg %p228
    $region30: #{refine_forward.1} parent=5 // pred_check_branch
      %231 = sbr.rel (%p229) target = $region32
    $region31: #{refine_forward.1} parent=5 // pred_region
      // Predicated region
      $region33: #{refine_forward.1} parent=31 // pred_check
        %p232 = pneg %p33
      $region34: #{refine_forward.1} parent=31 // pred_check_branch
        %234 = sbr.rel (%p232) target = $region36
      $region35: #{refine_forward.1} parent=31 // pred_region
        %p235 = scmp.lt.s32.totalorder %s13, 1
        %s236 = scalar_select %p235, %s13, 1
        %s237 = smul.addr %s236, 2
        %s238 = smul.addr %s237, 4
        %s239 = scalar_lea.vmem %s0, %s238
      $region36: #{refine_forward.1} parent=31 // pred_fallthru
        _
      // Predicated region
      $region37: #{refine_forward.1} parent=31 // pred_check
        %p240 = pneg %p59
      $region38: #{refine_forward.1} parent=31 // pred_check_branch
        %242 = sbr.rel (%p240) target = $region40
      $region39: #{refine_forward.1} parent=31 // pred_region
        %p243 = scmp.lt.s32.totalorder %s13, 1
        %s244 = scalar_select %p243, %s13, 1
        %s245 = smul.addr %s244, 2
        %s246 = smul.addr %s245, 4
        %s247 = scalar_lea.vmem %s1, %s246
      $region40: #{refine_forward.1} parent=31 // pred_fallthru
        _
      // Predicated region
      $region41: #{refine_forward.1} parent=31 // pred_check
        %p248 = pneg %p85
      $region42: #{refine_forward.1} parent=31 // pred_check_branch
        %250 = sbr.rel (%p248) target = $region44
      $region43: #{refine_forward.1} parent=31 // pred_region
        %p251 = scmp.lt.s32.totalorder %s13, 1
        %s252 = scalar_select %p251, %s13, 1
        %s253 = smul.addr %s252, 2
        %s254 = scalar_lea.vmem %s2, %s253
      $region44: #{refine_forward.1} parent=31 // pred_fallthru
        _
    $region32: #{refine_forward.1} parent=5 // pred_fallthru
      _
    %p255 = scmp.le.s32.totalorder 1, %s13
    %p256 = scmp.lt.s32.totalorder %s13, 3
    %p257 = pnand %p255, %p256
    %p258 = pneg %p257
    // Predicated region
    $region45: #{refine_forward.1} parent=5 // pred_check
      _
    $region46: #{refine_forward.1} parent=5 // pred_check_branch
      %260 = sbr.rel (%p257) target = $region48
    $region47: #{refine_forward.1} parent=5 // pred_region
      %s261 = ssub.s32 %s13, 1
      %p262 = scmp.lt.s32.totalorder %s18, 1
      %s263 = scalar_select %p262, %s18, 1
      %s264 = smul.addr %s263, 2
      %s265 = smul.addr %s264, 4
      %s266 = scalar_lea.vmem %s0, %s265
      %p267 = pneg %p39
      %p268 = pneg %p36
      %p269 = scmp.lt.s32.totalorder %s18, 1
      %s270 = scalar_select %p269, %s18, 1
      %s271 = smul.addr %s270, 2
      %s272 = smul.addr %s271, 4
      %s273 = scalar_lea.vmem %s1, %s272
      %p274 = pneg %p65
      %p275 = pneg %p62
      %p276 = scmp.lt.s32.totalorder %s18, 1
      %s277 = scalar_select %p276, %s18, 1
      %s278 = smul.addr %s277, 2
      %s279 = scalar_lea.vmem %s2, %s278
      %p280 = pneg %p91
      %p281 = pneg %p88
      %p282 = pneg %p112
      %p283 = pneg %p109
      %p284 = pneg %p133
      %p285 = pneg %p130
      %p286 = pneg %p154
      %p287 = pneg %p151
      %p288 = pneg %p175
      %p289 = pneg %p172
      %p290 = pneg %p201
      %p291 = pneg %p198
      %p292 = scmp.lt.s32.totalorder %s18, 1
      %s293 = scalar_select %p292, %s18, 1
      %s294 = smul.addr %s293, 2
      %s295 = smul.addr %s294, 4
      %s296 = scalar_lea.vmem %s7, %s295
      %p297 = scmp.lt.s32.totalorder %s18, 1
      %s298 = scalar_select %p297, %s18, 1
      %s299 = smul.addr %s298, 2
      %s300 = smul.addr %s299, 4
      %s301 = scalar_lea.vmem %s0, %s300
      %p302 = scmp.lt.s32.totalorder %s18, 1
      %s303 = scalar_select %p302, %s18, 1
      %s304 = smul.addr %s303, 2
      %s305 = smul.addr %s304, 4
      %s306 = scalar_lea.vmem %s1, %s305
      %p307 = scmp.lt.s32.totalorder %s18, 1
      %s308 = scalar_select %p307, %s18, 1
      %s309 = smul.addr %s308, 2
      %s310 = scalar_lea.vmem %s2, %s309
      %p311 = scmp.lt.s32.totalorder %s18, 1
      %s312 = scalar_select %p311, %s18, 1
      %s313 = smul.addr %s312, 2
      %s314 = smul.addr %s313, 4
      %s315 = scalar_lea.vmem %s7, %s314
      %v317 = vld [vmem:[%s310] sm:$0x3]
      %v318 = vld [vmem:[%s306] sm:$0x77]
      %v320 = vlaneseq
      %v321 = vshrl.u32 %v320, 7
      %v322 = vsub.s32 0, %v321
      %v323 = vrot.slane %v317, %v322
      %v324 = vlaneseq
      %v325 = vshrl.u32 %v324, 7
      %v326 = vsub.s32 1, %v325
      %v327 = vrot.slane %v317, %v326
      %v328 = vcombine.low %v323, %v327
      %v330 = vmul.f32 %v318, %v328
      %v331 = vld [vmem:[%s301] sm:$0x77]
      %v332 = vsub.f32 1.0, %v317
      %v334 = vlaneseq
      %v335 = vshrl.u32 %v334, 7
      %v336 = vsub.s32 0, %v335
      %v337 = vrot.slane %v332, %v336
      %v338 = vlaneseq
      %v339 = vshrl.u32 %v338, 7
      %v340 = vsub.s32 1, %v339
      %v341 = vrot.slane %v332, %v340
      %v342 = vcombine.low %v337, %v341
      %v344 = vmul.f32 %v331, %v342
      %v345 = vadd.f32 %v330, %v344
      %v347 = vcombine.high %v345, %v345
      %vm351 = vcmask 1042432
      %v352 = vsel %vm351, %v345, %v323
      %v353 = vsel %vm351, %v347, %v327
      %354 = vst [vmem:[#allocation2] sm:$0xff] 0.0
      %355 = vst [vmem:[#allocation2 + $0x8] sm:$0xf] 0.0
      %357 = vrot.lane.b32.xlu0 %v352, 19
      %v358 = vpop.permute.xlu0 %357
      %vm360 = vcmask 281752
      %361 = vst.msk [vmem:[#allocation2] sm:$0xf] %vm360, %v358
      %362 = vrot.lane.b32.xlu0 %v352, 21
      %v363 = vpop.permute.xlu0 %362
      %vm365 = vcmask 429352
      %366 = vst.msk [vmem:[#allocation2] sm:$0xf] %vm365, %v363
      %367 = vrot.lane.b32.xlu0 %v352, 23
      %v368 = vpop.permute.xlu0 %367
      %vm370 = vcmask 576952
      %371 = vst.msk [vmem:[#allocation2] sm:$0xf] %vm370, %v368
      %372 = vrot.lane.b32.xlu0 %v352, 25
      %v373 = vpop.permute.xlu0 %372
      %vm375 = vcmask 724552
      %376 = vst.msk [vmem:[#allocation2] sm:$0xf] %vm375, %v373
      %377 = vrot.lane.b32.xlu0 %v352, 27
      %v378 = vpop.permute.xlu0 %377
      %vm380 = vcmask 872152
      %381 = vst.msk [vmem:[#allocation2] sm:$0xf] %vm380, %v378
      %382 = vrot.lane.b32.xlu0 %v352, 29
      %v383 = vpop.permute.xlu0 %382
      %vm385 = vcmask 1019752
      %386 = vst.msk [vmem:[#allocation2] sm:$0xf] %vm385, %v383
      %387 = vrot.lane.b32.xlu0 %v352, 31
      %v388 = vpop.permute.xlu0 %387
      %v389 = vrot.slane %v388, 4
      %vm390 = vcmask 252928
      %v391 = vsel %vm390, %v389, %v388
      %vm393 = vcmask 1044472
      %vm394 = vcmask 121860
      %vm395 = vmor %vm394, %vm393
      %396 = vst.msk [vmem:[#allocation2] sm:$0xff] %vm395, %v391
      %397 = vrot.lane.b32.xlu0 %v352, 33
      %v398 = vpop.permute.xlu0 %397
      %vm400 = vcmask 265352
      %401 = vst.msk [vmem:[#allocation2 + $0x4] sm:$0xf] %vm400, %v398
      %403 = vrot.lane.b32.xlu0 %v353, 35
      %v404 = vpop.permute.xlu0 %403
      %vm406 = vcmask 412952
      %407 = vst.msk [vmem:[#allocation2 + $0x4] sm:$0xf] %vm406, %v404
      %408 = vrot.lane.b32.xlu0 %v353, 37
      %v409 = vpop.permute.xlu0 %408
      %vm411 = vcmask 560552
      %412 = vst.msk [vmem:[#allocation2 + $0x4] sm:$0xf] %vm411, %v409
      %413 = vrot.lane.b32.xlu0 %v353, 39
      %v414 = vpop.permute.xlu0 %413
      %vm416 = vcmask 708152
      %417 = vst.msk [vmem:[#allocation2 + $0x4] sm:$0xf] %vm416, %v414
      %418 = vrot.lane.b32.xlu0 %v353, 41
      %v419 = vpop.permute.xlu0 %418
      %vm421 = vcmask 855752
      %422 = vst.msk [vmem:[#allocation2 + $0x4] sm:$0xf] %vm421, %v419
      %423 = vrot.lane.b32.xlu0 %v353, 43
      %v424 = vpop.permute.xlu0 %423
      %vm426 = vcmask 1003352
      %427 = vst.msk [vmem:[#allocation2 + $0x4] sm:$0xf] %vm426, %v424
      %428 = vrot.lane.b32.xlu0 %v353, 45
      %v429 = vpop.permute.xlu0 %428
      %v430 = vrot.slane %v429, 4
      %vm431 = vcmask 367616
      %v432 = vsel %vm431, %v430, %v429
      %vm434 = vcmask 1044456
      %vm435 = vcmask 105476
      %vm436 = vmor %vm435, %vm434
      %437 = vst.msk [vmem:[#allocation2 + $0x4] sm:$0xff] %vm436, %v432
      %438 = vrot.lane.b32.xlu0 %v353, 47
      %v439 = vpop.permute.xlu0 %438
      %vm441 = vcmask 248952
      %442 = vst.msk [vmem:[#allocation2 + $0x8] sm:$0xf] %vm441, %v439
      %443 = vrot.lane.b32.xlu0 %v353, 49
      %v444 = vpop.permute.xlu0 %443
      %vm446 = vcmask 396552
      %447 = vst.msk [vmem:[#allocation2 + $0x8] sm:$0xf] %vm446, %v444
      %v448 = vld [vmem:[#allocation2] sm:$0xff]
      %v449 = vld [vmem:[#allocation2 + $0x8] sm:$0xf]
      %v452 = vcombine.high %v448, %v448
      %v454 = vcombine.low %v448, %v448
      %v455 = vcombine.low %v449, %v449
      %456 = vrot.lane.b32.xlu0 %v454, 127
      %v457 = vpop.permute.xlu0 %456
      %458 = vrot.lane.b32.xlu0 %v448, 127
      %v459 = vpop.permute.xlu0 %458
      %460 = vrot.lane.b32.xlu0 %v455, 127
      %v461 = vpop.permute.xlu0 %460
      %vm462 = vcmask 1039360
      %v463 = vsel %vm462, %v457, %v459
      %v464 = vsel %vm462, %v459, %v461
      %468 = vrot.lane.b32.xlu0 %v448, 126
      %v469 = vpop.permute.xlu0 %468
      %470 = vrot.lane.b32.xlu0 %v452, 126
      %v471 = vpop.permute.xlu0 %470
      %472 = vrot.lane.b32.xlu0 %v449, 126
      %v473 = vpop.permute.xlu0 %472
      %vm474 = vcmask 1031168
      %v475 = vsel %vm474, %v469, %v471
      %v476 = vsel %vm474, %v471, %v473
      %480 = vrot.lane.b32.xlu0 %v454, 110
      %v481 = vpop.permute.xlu0 %480
      %482 = vrot.lane.b32.xlu0 %v448, 110
      %v483 = vpop.permute.xlu0 %482
      %484 = vrot.lane.b32.xlu0 %v455, 110
      %v485 = vpop.permute.xlu0 %484
      %vm486 = vcmask 900096
      %v487 = vsel %vm486, %v481, %v483
      %v488 = vsel %vm486, %v483, %v485
      %492 = vrot.lane.b32.xlu0 %v448, 109
      %v493 = vpop.permute.xlu0 %492
      %494 = vrot.lane.b32.xlu0 %v452, 109
      %v495 = vpop.permute.xlu0 %494
      %496 = vrot.lane.b32.xlu0 %v449, 109
      %v497 = vpop.permute.xlu0 %496
      %vm498 = vcmask 891904
      %v499 = vsel %vm498, %v493, %v495
      %v500 = vsel %vm498, %v495, %v497
      %504 = vrot.lane.b32.xlu0 %v454, 108
      %v505 = vpop.permute.xlu0 %504
      %506 = vrot.lane.b32.xlu0 %v448, 108
      %v507 = vpop.permute.xlu0 %506
      %508 = vrot.lane.b32.xlu0 %v455, 108
      %v509 = vpop.permute.xlu0 %508
      %vm510 = vcmask 883712
      %v511 = vsel %vm510, %v505, %v507
      %v512 = vsel %vm510, %v507, %v509
      %516 = vrot.lane.b32.xlu0 %v448, 92
      %v517 = vpop.permute.xlu0 %516
      %518 = vrot.lane.b32.xlu0 %v452, 92
      %v519 = vpop.permute.xlu0 %518
      %520 = vrot.lane.b32.xlu0 %v449, 92
      %v521 = vpop.permute.xlu0 %520
      %vm522 = vcmask 752640
      %v523 = vsel %vm522, %v517, %v519
      %v524 = vsel %vm522, %v519, %v521
      %528 = vrot.lane.b32.xlu0 %v454, 91
      %v529 = vpop.permute.xlu0 %528
      %530 = vrot.lane.b32.xlu0 %v448, 91
      %v531 = vpop.permute.xlu0 %530
      %532 = vrot.lane.b32.xlu0 %v455, 91
      %v533 = vpop.permute.xlu0 %532
      %vm534 = vcmask 744448
      %v535 = vsel %vm534, %v529, %v531
      %v536 = vsel %vm534, %v531, %v533
      %540 = vrot.lane.b32.xlu0 %v448, 90
      %v541 = vpop.permute.xlu0 %540
      %542 = vrot.lane.b32.xlu0 %v452, 90
      %v543 = vpop.permute.xlu0 %542
      %544 = vrot.lane.b32.xlu0 %v449, 90
      %v545 = vpop.permute.xlu0 %544
      %vm546 = vcmask 736256
      %v547 = vsel %vm546, %v541, %v543
      %v548 = vsel %vm546, %v543, %v545
      %vm552 = vcmask 1043456
      %v553 = vsel %vm552, %v448, %v463
      %v554 = vsel %vm552, %v452, %v464
      %v555 = vsel %vm552, %v449, %v461
      %v556 = vsel %vm552, %v475, %v487
      %v557 = vsel %vm552, %v476, %v488
      %v558 = vsel %vm552, %v473, %v485
      %v559 = vsel %vm552, %v499, %v511
      %v560 = vsel %vm552, %v500, %v512
      %v561 = vsel %vm552, %v497, %v509
      %v562 = vsel %vm552, %v523, %v535
      %v563 = vsel %vm552, %v524, %v536
      %v564 = vsel %vm552, %v521, %v533
      %v565 = vld [vmem:[%s3] sm:$0xff]
      %v566 = vld [vmem:[%s3 + $0x8] sm:$0xff]
      %v567 = vpack.c.bf16 %v566, %v565
      %v568 = vpack.c.bf16 %v556, %v553
      %v569 = vpack.c.bf16 %v557, %v554
      %v570 = vpack.c.bf16 %v558, %v555
      %v571 = vpack.c.bf16 %v562, %v559
      %v572 = vpack.c.bf16 %v563, %v560
      %v573 = vpack.c.bf16 %v564, %v561
      %v574 = vpack.c.bf16 %v547, %v547
      %v575 = vpack.c.bf16 %v548, %v548
      %v576 = vpack.c.bf16 %v545, %v545
      %v577 = vld [vmem:[%s4] sm:$0xff]
      %v578 = vld [vmem:[%s4 + $0x8] sm:$0xff]
      %580 = vset.pattern.permute.xlu0 0
      %581 = vperm.xlu0 %580, %v577
      %v582 = vpop.permute.xlu0 %581
      %585 = vset.pattern.permute.xlu0 0
      %586 = vperm.xlu0 %585, %v578
      %v587 = vpop.permute.xlu0 %586
      %vm589 = vcmask 293888
      %v591 = vsel %vm589, %v567, 0
      %vm593 = vcmask 1041408
      %v595 = vsel %vm593, %v574, 0
      %v598 = vsel %vm593, %v575, 0
      %v601 = vsel %vm593, %v576, 0
      %603 = vmatprep.subr.bf16.mxu0 0
      %604 = vmatpush1.bf16.msra.mxu0 0
      %605 = vmatprep.subr.bf16.mxu0 0
      %606 = vmatpush1.bf16.msra.mxu0 0
      %607 = vmatprep.subr.bf16.mxu0 0
      %608 = vmatpush1.bf16.msra.mxu0 0
      %609 = vmatprep.subr.bf16.mxu0 0
      %610 = vmatpush1.bf16.msra.mxu0 0
      %611 = vmatprep.subr.bf16.mxu0 0
      %612 = vmatpush1.bf16.msra.mxu0 0
      %613 = vmatprep.subr.bf16.mxu0 %v598
      %614 = vmatpush1.bf16.msra.mxu0 %v595
      %615 = vmatprep.subr.bf16.mxu0 %v572
      %616 = vmatpush1.bf16.msra.mxu0 %v571
      %617 = vmatprep.subr.bf16.mxu0 %v569
      %618 = vmatpush1.bf16.msra.mxu0 %v568
      %619 = vmatprep.subr.bf16.mxu0 0
      %620 = vmatpush2.bf16.msra.mxu0 0
      %621 = vmatprep.subr.bf16.mxu0 0
      %622 = vmatpush2.bf16.msra.mxu0 0
      %623 = vmatprep.subr.bf16.mxu0 0
      %624 = vmatpush2.bf16.msra.mxu0 0
      %625 = vmatprep.subr.bf16.mxu0 0
      %626 = vmatpush2.bf16.msra.mxu0 0
      %627 = vmatprep.subr.bf16.mxu0 0
      %628 = vmatpush2.bf16.msra.mxu0 0
      %629 = vmatprep.subr.bf16.mxu0 0
      %630 = vmatpush2.bf16.msra.mxu0 0
      %631 = vmatprep.subr.bf16.mxu0 0
      %632 = vmatpush2.bf16.msra.mxu0 0
      %633 = vmatprep.subr.bf16.mxu0 0
      %634 = vmatpush2.bf16.msra.mxu0 0
      %635 = vmatprep.mubr.bf16.mxu0 0
      %636 = vmatmul.mubr.bf16.gmra.mxu0 %v591
      %v637 = vpop.f32.mrf.mxu0
      %v638 = vadd.f32 %v582, %v637
      %v639 = vpop.f32.mrf.mxu0
      %v640 = vadd.f32 %v582, %v639
      %v641 = vpop.f32.mrf.mxu0
      %v642 = vadd.f32 %v587, %v641
      %v643 = vpop.f32.mrf.mxu0
      %v644 = vadd.f32 %v587, %v643
      %645 = vdwg.mxu0
      %646 = vmatprep.subr.bf16.mxu0 0
      %647 = vmatpush1.bf16.msra.mxu0 0
      %648 = vmatprep.subr.bf16.mxu0 0
      %649 = vmatpush1.bf16.msra.mxu0 0
      %650 = vmatprep.subr.bf16.mxu0 0
      %651 = vmatpush1.bf16.msra.mxu0 0
      %652 = vmatprep.subr.bf16.mxu0 0
      %653 = vmatpush1.bf16.msra.mxu0 0
      %654 = vmatprep.subr.bf16.mxu0 0
      %655 = vmatpush1.bf16.msra.mxu0 0
      %656 = vmatprep.subr.bf16.mxu0 0
      %657 = vmatpush1.bf16.msra.mxu0 %v601
      %658 = vmatprep.subr.bf16.mxu0 0
      %659 = vmatpush1.bf16.msra.mxu0 %v573
      %660 = vmatprep.subr.bf16.mxu0 0
      %661 = vmatpush1.bf16.msra.mxu0 %v570
      %662 = vmatprep.subr.bf16.mxu0 0
      %663 = vmatpush2.bf16.msra.mxu0 0
      %664 = vmatprep.subr.bf16.mxu0 0
      %665 = vmatpush2.bf16.msra.mxu0 0
      %666 = vmatprep.subr.bf16.mxu0 0
      %667 = vmatpush2.bf16.msra.mxu0 0
      %668 = vmatprep.subr.bf16.mxu0 0
      %669 = vmatpush2.bf16.msra.mxu0 0
      %670 = vmatprep.subr.bf16.mxu0 0
      %671 = vmatpush2.bf16.msra.mxu0 0
      %672 = vmatprep.subr.bf16.mxu0 0
      %673 = vmatpush2.bf16.msra.mxu0 0
      %674 = vmatprep.subr.bf16.mxu0 0
      %675 = vmatpush2.bf16.msra.mxu0 0
      %676 = vmatprep.subr.bf16.mxu0 0
      %677 = vmatpush2.bf16.msra.mxu0 0
      %678 = vmatprep.mubr.bf16.mxu0 0
      %679 = vmatmul.mubr.bf16.gmra.mxu0 %v591
      %v680 = vpop.f32.mrf.mxu0
      %v681 = vadd.f32 %v582, %v680
      %v682 = vpop.f32.mrf.mxu0
      %v683 = vpop.f32.mrf.mxu0
      %v684 = vadd.f32 %v587, %v683
      %v685 = vpop.f32.mrf.mxu0
      %686 = vdwg.mxu0
      %v687 = vmax.f32 %v638, 0.0
      %v688 = vmax.f32 %v640, 0.0
      %v689 = vmax.f32 %v681, 0.0
      %v690 = vmax.f32 %v642, 0.0
      %v691 = vmax.f32 %v644, 0.0
      %v692 = vmax.f32 %v684, 0.0
      %693 = vst [vmem:[#allocation3] sm:$0xff] 0.0
      %694 = vst [vmem:[#allocation3 + $0x8] sm:$0xff] 0.0
      %695 = vst [vmem:[#allocation3 + $0x10] sm:$0xff] 0.0
      %696 = vst [vmem:[#allocation3 + $0x18] sm:$0xff] 0.0
      %697 = vst [vmem:[#allocation3 + $0x20] sm:$0xff] 0.0
      %698 = vst [vmem:[#allocation3 + $0x28] sm:$0xff] 0.0
      %701 = vrot.lane.b32.xlu0 %v687, 19
      %v702 = vpop.permute.xlu0 %701
      %703 = vrot.lane.b32.xlu0 %v690, 19
      %v704 = vpop.permute.xlu0 %703
      %vm707 = vcmask 285848
      %708 = vst.msk [vmem:[#allocation3] sm:$0xff] %vm707, %v702
      %709 = vst.msk [vmem:[#allocation3 + $0x18] sm:$0xff] %vm707, %v704
      %vm710 = vcmask 433448
      %711 = vst.msk [vmem:[#allocation3] sm:$0xff] %vm710, %v702
      %712 = vst.msk [vmem:[#allocation3 + $0x18] sm:$0xff] %vm710, %v704
      %vm713 = vcmask 581048
      %714 = vst.msk [vmem:[#allocation3] sm:$0xff] %vm713, %v702
      %715 = vst.msk [vmem:[#allocation3 + $0x18] sm:$0xff] %vm713, %v704
      %vm716 = vcmask 728648
      %717 = vst.msk [vmem:[#allocation3] sm:$0xff] %vm716, %v702
      %718 = vst.msk [vmem:[#allocation3 + $0x18] sm:$0xff] %vm716, %v704
      %vm719 = vcmask 876248
      %720 = vst.msk [vmem:[#allocation3] sm:$0xff] %vm719, %v702
      %721 = vst.msk [vmem:[#allocation3 + $0x18] sm:$0xff] %vm719, %v704
      %vm722 = vcmask 1023848
      %723 = vst.msk [vmem:[#allocation3] sm:$0xff] %vm722, %v702
      %724 = vst.msk [vmem:[#allocation3 + $0x18] sm:$0xff] %vm722, %v704
      %vm725 = vcmask 1048568
      %726 = vst.msk [vmem:[#allocation3] sm:$0xff] %vm725, %v702
      %vm727 = vcmask 121856
      %728 = vst.msk [vmem:[#allocation3 + $0x8] sm:$0xff] %vm727, %v702
      %729 = vst.msk [vmem:[#allocation3 + $0x18] sm:$0xff] %vm725, %v704
      %730 = vst.msk [vmem:[#allocation3 + $0x20] sm:$0xff] %vm727, %v704
      %733 = vrot.lane.b32.xlu0 %v688, 19
      %v734 = vpop.permute.xlu0 %733
      %735 = vrot.lane.b32.xlu0 %v691, 19
      %v736 = vpop.permute.xlu0 %735
      %vm737 = vcmask 154624
      %v738 = vsel %vm737, %v702, %v734
      %v739 = vsel %vm737, %v704, %v736
      %vm742 = vcmask 269448
      %743 = vst.msk [vmem:[#allocation3 + $0x8] sm:$0xff] %vm742, %v738
      %744 = vst.msk [vmem:[#allocation3 + $0x20] sm:$0xff] %vm742, %v739
      %vm747 = vcmask 417048
      %748 = vst.msk [vmem:[#allocation3 + $0x8] sm:$0xff] %vm747, %v734
      %749 = vst.msk [vmem:[#allocation3 + $0x20] sm:$0xff] %vm747, %v736
      %vm750 = vcmask 564648
      %751 = vst.msk [vmem:[#allocation3 + $0x8] sm:$0xff] %vm750, %v734
      %752 = vst.msk [vmem:[#allocation3 + $0x20] sm:$0xff] %vm750, %v736
      %vm753 = vcmask 712248
      %754 = vst.msk [vmem:[#allocation3 + $0x8] sm:$0xff] %vm753, %v734
      %755 = vst.msk [vmem:[#allocation3 + $0x20] sm:$0xff] %vm753, %v736
      %vm756 = vcmask 859848
      %757 = vst.msk [vmem:[#allocation3 + $0x8] sm:$0xff] %vm756, %v734
      %758 = vst.msk [vmem:[#allocation3 + $0x20] sm:$0xff] %vm756, %v736
      %vm759 = vcmask 1007448
      %760 = vst.msk [vmem:[#allocation3 + $0x8] sm:$0xff] %vm759, %v734
      %761 = vst.msk [vmem:[#allocation3 + $0x20] sm:$0xff] %vm759, %v736
      %vm762 = vcmask 1048552
      %763 = vst.msk [vmem:[#allocation3 + $0x8] sm:$0xff] %vm762, %v734
      %vm764 = vcmask 105472
      %765 = vst.msk [vmem:[#allocation3 + $0x10] sm:$0xff] %vm764, %v734
      %766 = vst.msk [vmem:[#allocation3 + $0x20] sm:$0xff] %vm762, %v736
      %767 = vst.msk [vmem:[#allocation3 + $0x28] sm:$0xff] %vm764, %v736
      %770 = vrot.lane.b32.xlu0 %v689, 19
      %v771 = vpop.permute.xlu0 %770
      %772 = vrot.lane.b32.xlu0 %v692, 19
      %v773 = vpop.permute.xlu0 %772
      %v774 = vsel %vm737, %v734, %v771
      %v775 = vsel %vm737, %v736, %v773
      %vm778 = vcmask 253048
      %779 = vst.msk [vmem:[#allocation3 + $0x10] sm:$0xff] %vm778, %v774
      %780 = vst.msk [vmem:[#allocation3 + $0x28] sm:$0xff] %vm778, %v775
      %vm783 = vcmask 400648
      %784 = vst.msk [vmem:[#allocation3 + $0x10] sm:$0xff] %vm783, %v771
      %785 = vst.msk [vmem:[#allocation3 + $0x28] sm:$0xff] %vm783, %v773
      %v786 = vld [vmem:[#allocation3] sm:$0xff]
      %v787 = vld [vmem:[#allocation3 + $0x8] sm:$0xff]
      %v788 = vld [vmem:[#allocation3 + $0x10] sm:$0xff]
      %v789 = vld [vmem:[#allocation3 + $0x18] sm:$0xff]
      %v790 = vld [vmem:[#allocation3 + $0x20] sm:$0xff]
      %v791 = vld [vmem:[#allocation3 + $0x28] sm:$0xff]
      %798 = vrot.lane.b32.xlu0 %v786, 127
      %v799 = vpop.permute.xlu0 %798
      %800 = vrot.lane.b32.xlu0 %v787, 127
      %v801 = vpop.permute.xlu0 %800
      %802 = vrot.lane.b32.xlu0 %v788, 127
      %v803 = vpop.permute.xlu0 %802
      %804 = vrot.lane.b32.xlu0 %v789, 127
      %v805 = vpop.permute.xlu0 %804
      %806 = vrot.lane.b32.xlu0 %v790, 127
      %v807 = vpop.permute.xlu0 %806
      %808 = vrot.lane.b32.xlu0 %v791, 127
      %v809 = vpop.permute.xlu0 %808
      %v810 = vsel %vm462, %v799, %v801
      %v811 = vsel %vm462, %v801, %v803
      %v812 = vsel %vm462, %v805, %v807
      %v813 = vsel %vm462, %v807, %v809
      %820 = vrot.lane.b32.xlu0 %v786, 126
      %v821 = vpop.permute.xlu0 %820
      %822 = vrot.lane.b32.xlu0 %v787, 126
      %v823 = vpop.permute.xlu0 %822
      %824 = vrot.lane.b32.xlu0 %v788, 126
      %v825 = vpop.permute.xlu0 %824
      %826 = vrot.lane.b32.xlu0 %v789, 126
      %v827 = vpop.permute.xlu0 %826
      %828 = vrot.lane.b32.xlu0 %v790, 126
      %v829 = vpop.permute.xlu0 %828
      %830 = vrot.lane.b32.xlu0 %v791, 126
      %v831 = vpop.permute.xlu0 %830
      %v832 = vsel %vm474, %v821, %v823
      %v833 = vsel %vm474, %v823, %v825
      %v834 = vsel %vm474, %v827, %v829
      %v835 = vsel %vm474, %v829, %v831
      %842 = vrot.lane.b32.xlu0 %v786, 110
      %v843 = vpop.permute.xlu0 %842
      %844 = vrot.lane.b32.xlu0 %v787, 110
      %v845 = vpop.permute.xlu0 %844
      %846 = vrot.lane.b32.xlu0 %v788, 110
      %v847 = vpop.permute.xlu0 %846
      %848 = vrot.lane.b32.xlu0 %v789, 110
      %v849 = vpop.permute.xlu0 %848
      %850 = vrot.lane.b32.xlu0 %v790, 110
      %v851 = vpop.permute.xlu0 %850
      %852 = vrot.lane.b32.xlu0 %v791, 110
      %v853 = vpop.permute.xlu0 %852
      %v854 = vsel %vm486, %v843, %v845
      %v855 = vsel %vm486, %v845, %v847
      %v856 = vsel %vm486, %v849, %v851
      %v857 = vsel %vm486, %v851, %v853
      %864 = vrot.lane.b32.xlu0 %v786, 109
      %v865 = vpop.permute.xlu0 %864
      %866 = vrot.lane.b32.xlu0 %v787, 109
      %v867 = vpop.permute.xlu0 %866
      %868 = vrot.lane.b32.xlu0 %v788, 109
      %v869 = vpop.permute.xlu0 %868
      %870 = vrot.lane.b32.xlu0 %v789, 109
      %v871 = vpop.permute.xlu0 %870
      %872 = vrot.lane.b32.xlu0 %v790, 109
      %v873 = vpop.permute.xlu0 %872
      %874 = vrot.lane.b32.xlu0 %v791, 109
      %v875 = vpop.permute.xlu0 %874
      %v876 = vsel %vm498, %v865, %v867
      %v877 = vsel %vm498, %v867, %v869
      %v878 = vsel %vm498, %v871, %v873
      %v879 = vsel %vm498, %v873, %v875
      %886 = vrot.lane.b32.xlu0 %v786, 108
      %v887 = vpop.permute.xlu0 %886
      %888 = vrot.lane.b32.xlu0 %v787, 108
      %v889 = vpop.permute.xlu0 %888
      %890 = vrot.lane.b32.xlu0 %v788, 108
      %v891 = vpop.permute.xlu0 %890
      %892 = vrot.lane.b32.xlu0 %v789, 108
      %v893 = vpop.permute.xlu0 %892
      %894 = vrot.lane.b32.xlu0 %v790, 108
      %v895 = vpop.permute.xlu0 %894
      %896 = vrot.lane.b32.xlu0 %v791, 108
      %v897 = vpop.permute.xlu0 %896
      %v898 = vsel %vm510, %v887, %v889
      %v899 = vsel %vm510, %v889, %v891
      %v900 = vsel %vm510, %v893, %v895
      %v901 = vsel %vm510, %v895, %v897
      %908 = vrot.lane.b32.xlu0 %v786, 92
      %v909 = vpop.permute.xlu0 %908
      %910 = vrot.lane.b32.xlu0 %v787, 92
      %v911 = vpop.permute.xlu0 %910
      %912 = vrot.lane.b32.xlu0 %v788, 92
      %v913 = vpop.permute.xlu0 %912
      %914 = vrot.lane.b32.xlu0 %v789, 92
      %v915 = vpop.permute.xlu0 %914
      %916 = vrot.lane.b32.xlu0 %v790, 92
      %v917 = vpop.permute.xlu0 %916
      %918 = vrot.lane.b32.xlu0 %v791, 92
      %v919 = vpop.permute.xlu0 %918
      %v920 = vsel %vm522, %v909, %v911
      %v921 = vsel %vm522, %v911, %v913
      %v922 = vsel %vm522, %v915, %v917
      %v923 = vsel %vm522, %v917, %v919
      %930 = vrot.lane.b32.xlu0 %v786, 91
      %v931 = vpop.permute.xlu0 %930
      %932 = vrot.lane.b32.xlu0 %v787, 91
      %v933 = vpop.permute.xlu0 %932
      %934 = vrot.lane.b32.xlu0 %v788, 91
      %v935 = vpop.permute.xlu0 %934
      %936 = vrot.lane.b32.xlu0 %v789, 91
      %v937 = vpop.permute.xlu0 %936
      %938 = vrot.lane.b32.xlu0 %v790, 91
      %v939 = vpop.permute.xlu0 %938
      %940 = vrot.lane.b32.xlu0 %v791, 91
      %v941 = vpop.permute.xlu0 %940
      %v942 = vsel %vm534, %v931, %v933
      %v943 = vsel %vm534, %v933, %v935
      %v944 = vsel %vm534, %v937, %v939
      %v945 = vsel %vm534, %v939, %v941
      %952 = vrot.lane.b32.xlu0 %v786, 90
      %v953 = vpop.permute.xlu0 %952
      %954 = vrot.lane.b32.xlu0 %v787, 90
      %v955 = vpop.permute.xlu0 %954
      %956 = vrot.lane.b32.xlu0 %v788, 90
      %v957 = vpop.permute.xlu0 %956
      %958 = vrot.lane.b32.xlu0 %v789, 90
      %v959 = vpop.permute.xlu0 %958
      %960 = vrot.lane.b32.xlu0 %v790, 90
      %v961 = vpop.permute.xlu0 %960
      %962 = vrot.lane.b32.xlu0 %v791, 90
      %v963 = vpop.permute.xlu0 %962
      %v964 = vsel %vm546, %v953, %v955
      %v965 = vsel %vm546, %v955, %v957
      %v966 = vsel %vm546, %v959, %v961
      %v967 = vsel %vm546, %v961, %v963
      %v974 = vld [vmem:[%s5] sm:$0x77]
      %v976 = vcombine.high %v974, %v974
      %v978 = vpack.c.bf16 %v974, %v974
      %v979 = vpack.c.bf16 %v976, %v976
      %v980 = vpack.c.bf16 %v789, %v786
      %v981 = vpack.c.bf16 %v790, %v787
      %v982 = vpack.c.bf16 %v791, %v788
      %v983 = vpack.c.bf16 %v812, %v810
      %v984 = vpack.c.bf16 %v813, %v811
      %v985 = vpack.c.bf16 %v809, %v803
      %v986 = vpack.c.bf16 %v834, %v832
      %v987 = vpack.c.bf16 %v835, %v833
      %v988 = vpack.c.bf16 %v831, %v825
      %v989 = vpack.c.bf16 %v856, %v854
      %v990 = vpack.c.bf16 %v857, %v855
      %v991 = vpack.c.bf16 %v853, %v847
      %v992 = vpack.c.bf16 %v878, %v876
      %v993 = vpack.c.bf16 %v879, %v877
      %v994 = vpack.c.bf16 %v875, %v869
      %v995 = vpack.c.bf16 %v900, %v898
      %v996 = vpack.c.bf16 %v901, %v899
      %v997 = vpack.c.bf16 %v897, %v891
      %v998 = vpack.c.bf16 %v922, %v920
      %v999 = vpack.c.bf16 %v923, %v921
      %v1000 = vpack.c.bf16 %v919, %v913
      %v1001 = vpack.c.bf16 %v944, %v942
      %v1002 = vpack.c.bf16 %v945, %v943
      %v1003 = vpack.c.bf16 %v941, %v935
      %v1004 = vpack.c.bf16 %v966, %v964
      %v1005 = vpack.c.bf16 %v967, %v965
      %v1006 = vpack.c.bf16 %v963, %v957
      %v1007 = vld [vmem:[%s6] sm:$0x7]
      %1009 = vset.pattern.permute.xlu0 0
      %1010 = vperm.xlu0 %1009, %v1007
      %v1011 = vpop.permute.xlu0 %1010
      %vm1013 = vcmask 130048
      %v1015 = vsel %vm1013, %v979, 0
      %1017 = vmatprep.subr.bf16.mxu0 %v1002
      %1018 = vmatpush1.bf16.msra.mxu0 %v1001
      %1019 = vmatprep.subr.bf16.mxu0 %v999
      %1020 = vmatpush1.bf16.msra.mxu0 %v998
      %1021 = vmatprep.subr.bf16.mxu0 %v996
      %1022 = vmatpush1.bf16.msra.mxu0 %v995
      %1023 = vmatprep.subr.bf16.mxu0 %v993
      %1024 = vmatpush1.bf16.msra.mxu0 %v992
      %1025 = vmatprep.subr.bf16.mxu0 %v990
      %1026 = vmatpush1.bf16.msra.mxu0 %v989
      %1027 = vmatprep.subr.bf16.mxu0 %v987
      %1028 = vmatpush1.bf16.msra.mxu0 %v986
      %1029 = vmatprep.subr.bf16.mxu0 %v984
      %1030 = vmatpush1.bf16.msra.mxu0 %v983
      %1031 = vmatprep.subr.bf16.mxu0 %v981
      %1032 = vmatpush1.bf16.msra.mxu0 %v980
      %1033 = vmatprep.subr.bf16.mxu0 0
      %1034 = vmatpush2.bf16.msra.mxu0 0
      %1035 = vmatprep.subr.bf16.mxu0 0
      %1036 = vmatpush2.bf16.msra.mxu0 0
      %1037 = vmatprep.subr.bf16.mxu0 0
      %1038 = vmatpush2.bf16.msra.mxu0 0
      %1039 = vmatprep.subr.bf16.mxu0 0
      %1040 = vmatpush2.bf16.msra.mxu0 0
      %1041 = vmatprep.subr.bf16.mxu0 0
      %1042 = vmatpush2.bf16.msra.mxu0 0
      %1043 = vmatprep.subr.bf16.mxu0 0
      %1044 = vmatpush2.bf16.msra.mxu0 0
      %1045 = vmatprep.subr.bf16.mxu0 0
      %1046 = vmatpush2.bf16.msra.mxu0 0
      %1047 = vmatprep.subr.bf16.mxu0 %v1005
      %1048 = vmatpush2.bf16.msra.mxu0 %v1004
      %1049 = vmatprep.mubr.bf16.mxu0 %v1015
      %1050 = vmatmul.mubr.bf16.gmra.mxu0 %v978
      %v1051 = vpop.f32.mrf.mxu0
      %v1052 = vadd.f32 %v1011, %v1051
      %v1053 = vpop.f32.mrf.mxu0
      %v1054 = vadd.f32 %v1011, %v1053
      %v1055 = vpop.f32.mrf.mxu0
      %v1056 = vpop.f32.mrf.mxu0
      %1057 = vdwg.mxu0
      %1058 = vmatprep.subr.bf16.mxu0 0
      %1059 = vmatpush1.bf16.msra.mxu0 %v1003
      %1060 = vmatprep.subr.bf16.mxu0 0
      %1061 = vmatpush1.bf16.msra.mxu0 %v1000
      %1062 = vmatprep.subr.bf16.mxu0 0
      %1063 = vmatpush1.bf16.msra.mxu0 %v997
      %1064 = vmatprep.subr.bf16.mxu0 0
      %1065 = vmatpush1.bf16.msra.mxu0 %v994
      %1066 = vmatprep.subr.bf16.mxu0 0
      %1067 = vmatpush1.bf16.msra.mxu0 %v991
      %1068 = vmatprep.subr.bf16.mxu0 0
      %1069 = vmatpush1.bf16.msra.mxu0 %v988
      %1070 = vmatprep.subr.bf16.mxu0 0
      %1071 = vmatpush1.bf16.msra.mxu0 %v985
      %1072 = vmatprep.subr.bf16.mxu0 0
      %1073 = vmatpush1.bf16.msra.mxu0 %v982
      %1074 = vmatprep.subr.bf16.mxu0 0
      %1075 = vmatpush2.bf16.msra.mxu0 0
      %1076 = vmatprep.subr.bf16.mxu0 0
      %1077 = vmatpush2.bf16.msra.mxu0 0
      %1078 = vmatprep.subr.bf16.mxu0 0
      %1079 = vmatpush2.bf16.msra.mxu0 0
      %1080 = vmatprep.subr.bf16.mxu0 0
      %1081 = vmatpush2.bf16.msra.mxu0 0
      %1082 = vmatprep.subr.bf16.mxu0 0
      %1083 = vmatpush2.bf16.msra.mxu0 0
      %1084 = vmatprep.subr.bf16.mxu0 0
      %1085 = vmatpush2.bf16.msra.mxu0 0
      %1086 = vmatprep.subr.bf16.mxu0 0
      %1087 = vmatpush2.bf16.msra.mxu0 0
      %1088 = vmatprep.subr.bf16.mxu0 0
      %1089 = vmatpush2.bf16.msra.mxu0 %v1006
      %1090 = vmatprep.mubr.bf16.mxu0 %v1015
      %1091 = vmatmul.mubr.bf16.gmra.mxu0 %v978
      %v1092 = vpop.f32.mrf.mxu0
      %v1093 = vadd.f32 %v1011, %v1092
      %v1094 = vpop.f32.mrf.mxu0
      %v1095 = vpop.f32.mrf.mxu0
      %v1096 = vpop.f32.mrf.mxu0
      %1097 = vdwg.mxu0
      %v1098 = vxor.u32 %v1052, 2147483648
      %v1099 = vxor.u32 %v1054, 2147483648
      %v1100 = vxor.u32 %v1093, 2147483648
      %v1101 = vmul.f32 %v1098, 1.442695
      %v1102 = vpow.pop %v1101
      %v1103 = vmul.f32 %v1099, 1.442695
      %v1104 = vpow.pop %v1103
      %v1105 = vmul.f32 %v1100, 1.442695
      %v1106 = vpow.pop %v1105
      %v1107 = vadd.f32 %v1102, 1.0
      %v1108 = vadd.f32 %v1104, 1.0
      %v1109 = vadd.f32 %v1106, 1.0
      %v1110 = vrcp.pop %v1107
      %v1111 = vmul.f32 1.0, %v1110
      %v1112 = vrcp.pop %v1108
      %v1113 = vmul.f32 1.0, %v1112
      %v1114 = vrcp.pop %v1109
      %v1115 = vmul.f32 1.0, %v1114
      %vm1116 = vcmask 124928
      %1117 = vst.msk [vmem:[%s315] sm:$0x7] %vm1116, %v1111
      %1119 = vrot.lane.b32.xlu0 %v1111, 126
      %v1120 = vpop.permute.xlu0 %1119
      %vm1122 = vcmask 256128
      %1123 = vst.msk [vmem:[%s315] sm:$0x7] %vm1122, %v1120
      %1124 = vrot.lane.b32.xlu0 %v1111, 124
      %v1125 = vpop.permute.xlu0 %1124
      %vm1127 = vcmask 387328
      %1128 = vst.msk [vmem:[%s315] sm:$0x7] %vm1127, %v1125
      %1129 = vrot.lane.b32.xlu0 %v1111, 122
      %v1130 = vpop.permute.xlu0 %1129
      %vm1132 = vcmask 518528
      %1133 = vst.msk [vmem:[%s315] sm:$0x7] %vm1132, %v1130
      %1134 = vrot.lane.b32.xlu0 %v1111, 120
      %v1135 = vpop.permute.xlu0 %1134
      %vm1137 = vcmask 649728
      %1138 = vst.msk [vmem:[%s315] sm:$0x7] %vm1137, %v1135
      %1139 = vrot.lane.b32.xlu0 %v1111, 118
      %v1140 = vpop.permute.xlu0 %1139
      %vm1142 = vcmask 780928
      %1143 = vst.msk [vmem:[%s315] sm:$0x7] %vm1142, %v1140
      %1144 = vrot.lane.b32.xlu0 %v1111, 116
      %v1145 = vpop.permute.xlu0 %1144
      %vm1147 = vcmask 912128
      %1148 = vst.msk [vmem:[%s315] sm:$0x7] %vm1147, %v1145
      %v1150 = vcombine.low %v1111, %v1113
      %1151 = vrot.lane.b32.xlu0 %v1150, 114
      %v1152 = vpop.permute.xlu0 %1151
      %v1153 = vrot.slane %v1152, 4
      %vm1154 = vcmask 932864
      %v1155 = vsel %vm1154, %v1152, %v1153
      %vm1157 = vcmask 1043328
      %1158 = vst.msk [vmem:[%s315] sm:$0x7] %vm1157, %v1155
      %1159 = vrot.lane.b32.xlu0 %v1113, 112
      %v1160 = vpop.permute.xlu0 %1159
      %1162 = vst.msk [vmem:[%s315 + $0x4] sm:$0x7] %vm1116, %v1160
      %1163 = vrot.lane.b32.xlu0 %v1113, 110
      %v1164 = vpop.permute.xlu0 %1163
      %1166 = vst.msk [vmem:[%s315 + $0x4] sm:$0x7] %vm1122, %v1164
      %1167 = vrot.lane.b32.xlu0 %v1113, 108
      %v1168 = vpop.permute.xlu0 %1167
      %1170 = vst.msk [vmem:[%s315 + $0x4] sm:$0x7] %vm1127, %v1168
      %1171 = vrot.lane.b32.xlu0 %v1113, 106
      %v1172 = vpop.permute.xlu0 %1171
      %1174 = vst.msk [vmem:[%s315 + $0x4] sm:$0x7] %vm1132, %v1172
      %1175 = vrot.lane.b32.xlu0 %v1113, 104
      %v1176 = vpop.permute.xlu0 %1175
      %1178 = vst.msk [vmem:[%s315 + $0x4] sm:$0x7] %vm1137, %v1176
      %1179 = vrot.lane.b32.xlu0 %v1113, 102
      %v1180 = vpop.permute.xlu0 %1179
      %1182 = vst.msk [vmem:[%s315 + $0x4] sm:$0x7] %vm1142, %v1180
      %v1184 = vcombine.low %v1113, %v1115
      %1185 = vrot.lane.b32.xlu0 %v1184, 100
      %v1186 = vpop.permute.xlu0 %1185
      %v1187 = vrot.slane %v1186, 4
      %vm1188 = vcmask 818176
      %v1189 = vsel %vm1188, %v1186, %v1187
      %1191 = vst.msk [vmem:[%s315 + $0x4] sm:$0x7] %vm1147, %v1189
      %1192 = vrot.lane.b32.xlu0 %v1115, 98
      %v1193 = vpop.permute.xlu0 %1192
      %1195 = vst.msk [vmem:[%s315 + $0x4] sm:$0x7] %vm1157, %v1193
      %p1196 = scmp.lt.s32.totalorder %s18, 1
      %s1197 = scalar_select %p1196, %s18, 1
      %s1198 = smul.addr %s1197, 2
      %s1199 = smul.addr %s1198, 4
      %s1200 = scalar_lea.vmem %s7, %s1199
      // Predicated region
      $region49: #{refine_forward.1} parent=47 // pred_check
        %p1201 = pneg %p198
      $region50: #{refine_forward.1} parent=47 // pred_check_branch
        %1203 = sbr.rel (%p1201) target = $region52
      $region51: #{refine_forward.1} parent=47 // pred_region
        _
      $region52: #{refine_forward.1} parent=47 // pred_fallthru
        _
    $region48: #{refine_forward.1} parent=5 // pred_fallthru
      _
    %p1204 = scmp.le.s32.totalorder 2, %s13
    // Predicated region
    $region53: #{refine_forward.1} parent=5 // pred_check
      %p1205 = pneg %p1204
    $region54: #{refine_forward.1} parent=5 // pred_check_branch
      %1207 = sbr.rel (%p1205) target = $region56
    $region55: #{refine_forward.1} parent=5 // pred_region
      %s1208 = ssub.s32 %s13, 2
      // Predicated region
      $region57: #{refine_forward.1} parent=55 // pred_check
        %p1209 = pneg %p204
      $region58: #{refine_forward.1} parent=55 // pred_check_branch
        %1211 = sbr.rel (%p1209) target = $region60
      $region59: #{refine_forward.1} parent=55 // pred_region
        %p1212 = scmp.lt.s32.totalorder %s19, 1
        %s1213 = scalar_select %p1212, %s19, 1
        %s1214 = smul.addr %s1213, 2
        %s1215 = smul.addr %s1214, 4
        %s1216 = scalar_lea.vmem %s7, %s1215
      $region60: #{refine_forward.1} parent=55 // pred_fallthru
        _
    $region56: #{refine_forward.1} parent=5 // pred_fallthru
      _
  $region6: #{refine_forward.1} parent=0 // loop_footer
    %s17 = sadd.s32 1, %s13
  $region7: #{refine_forward.1} parent=0 // loop_footer_branch
    %12 = sbr.rel target = $region3
  $region8: #{refine_forward.1} parent=0 // loop_exit
    _

</llo_original>
